<compile_context>
chip_gen: v7x
topology: tpu7x:2x2x1
jax: 0.10.0
libtpu: 0.0.40
codegen_flags: <defaults>
</compile_context>

<pallas_src>
import functools

import jax
import jax.numpy as jnp
from jax.experimental import pallas as pl
from jax.experimental.pallas import tpu as pltpu


# ----------------------------------------------------------------------------
# Kernel 1: conv-as-matmul.  out[c, r] = sum_k W[c, k] * patches[k, r] + bias[c]
# ----------------------------------------------------------------------------
def _conv_mm_kernel(w_ref, b_ref, p_ref, o_ref):
    # w_ref: (out_ch, K)   weights (resident, same block every step)
    # b_ref: (out_ch, 1)   bias
    # p_ref: (K, TR)       im2col patch tile (lane-dense along TR)
    # o_ref: (out_ch, TR)  conv output tile (lane-dense store)
    acc = jnp.dot(w_ref[...].astype(jnp.float32),
                  p_ref[...].astype(jnp.float32),
                  preferred_element_type=jnp.float32)
    o_ref[...] = (acc + b_ref[...]).astype(o_ref.dtype)


# ----------------------------------------------------------------------------
# Kernel 2: dynamic routing for one batch element.
#   x_ref: (1, ch_i, n_j, M) with M = ch_j * W * W  (lane axis)
#   o_ref: (1, n_j, M)       squashed output capsules
# ----------------------------------------------------------------------------
def _make_routing_kernel(r_num: int, eps: float = 1e-20):
    def kernel(x_ref, o_ref):
        ci = x_ref.shape[1]
        nj = x_ref.shape[2]
        m = x_ref.shape[3]
        x = x_ref[0].astype(jnp.float32)                # (ci, nj, M)

        b_log = jnp.zeros((ci, 1, m), jnp.float32)      # routing logits
        s_hat = jnp.zeros((nj, m), jnp.float32)

        for it in range(r_num):
            # softmax over the M = W*W*ch_j axis, per input-capsule channel.
            mx = jnp.max(b_log, axis=-1, keepdims=True)
            e = jnp.exp(b_log - mx)
            k = e / jnp.sum(e, axis=-1, keepdims=True)  # (ci, 1, M)

            # S = sum_{ch_i} k * x   (unrolled tiny contraction)
            wk = k * x                                  # (ci, nj, M)
            s = wk[0]
            for i in range(1, ci):
                s = s + wk[i]                           # (nj, M)

            # squash over a size-1 axis == elementwise |s| / (1 + s^2 + eps) * s
            nrm = jnp.abs(s)
            s_hat = nrm / (1.0 + s * s + eps) * s       # (nj, M)

            if it < r_num - 1:
                # agreements = sum_{n_j} s_hat * x      (unrolled tiny contraction)
                p = s_hat[None, :, :] * x               # (ci, nj, M)
                agree = p[:, 0:1, :]
                for j in range(1, nj):
                    agree = agree + p[:, j:j + 1, :]    # (ci, 1, M)
                b_log = b_log + agree

        o_ref[...] = s_hat[None, :, :].astype(o_ref.dtype)

    return kernel


# ----------------------------------------------------------------------------
# Full forward pass.
# ----------------------------------------------------------------------------
@functools.partial(jax.jit, static_argnames=("ch_j", "n_j", "kernel_size", "r_num"))
def conv_caps_layer_3d(inputs, weight, bias, *, ch_j, n_j, kernel_size=3, r_num=3):
    """inputs: (B, ch_i, n_i, H, W); weight: (ch_j*n_j, 1, k, k, k); bias: (ch_j*n_j,)."""
    B, ci, ni, h, wsp = inputs.shape
    assert kernel_size == 3, "module uses pad=(0,1,1); kernel_size=3 supported"
    assert h == wsp, "module requires square spatial dims"
    assert ni >= kernel_size, "depth stride must cover the kernel (n_i >= kernel_size)"
    out_ch = ch_j * n_j
    K = kernel_size ** 3

    # ---------------- im2col (layout plumbing; FLOPs happen on the MXU) -------
    x2 = inputs.reshape(B, ci * ni, h, wsp)
    xp = jnp.pad(x2, ((0, 0), (0, 0), (1, 1), (1, 1)))          # spatial pad 1
    taps = []
    for kd in range(kernel_size):
        # depth-strided slice -> output depth == ch_i
        dsl = xp[:, kd:kd + (ci - 1) * ni + 1:ni]               # (B, ci, h+2, w+2)
        for ky in range(kernel_size):
            for kx in range(kernel_size):
                taps.append(dsl[:, :, ky:ky + h, kx:kx + wsp])  # (B, ci, h, w)
    R = B * ci * h * wsp
    patches = jnp.stack(taps, axis=0).reshape(K, R)             # (K, R): R on lanes

    TR = 256                                                    # rows per grid step
    R_pad = ((R + TR - 1) // TR) * TR
    if R_pad != R:
        patches = jnp.pad(patches, ((0, 0), (0, R_pad - R)))

    w_mat = weight.reshape(out_ch, K).astype(jnp.float32)       # (out_ch, 27)
    b_col = bias.reshape(out_ch, 1).astype(jnp.float32)

    # ---------------- Pallas kernel 1: tiled, pipelined conv matmul -----------
    conv_t = pl.pallas_call(
        _conv_mm_kernel,
        out_shape=jax.ShapeDtypeStruct((out_ch, R_pad), jnp.float32),
        grid_spec=pltpu.PrefetchScalarGridSpec(
            num_scalar_prefetch=0,
            grid=(R_pad // TR,),
            in_specs=[
                pl.BlockSpec((out_ch, K), lambda r: (0, 0)),    # weights resident
                pl.BlockSpec((out_ch, 1), lambda r: (0, 0)),    # bias resident
                pl.BlockSpec((K, TR), lambda r: (0, r)),        # lane-dense patch tile
            ],
            out_specs=pl.BlockSpec((out_ch, TR), lambda r: (0, r)),
        ),
        compiler_params=pltpu.CompilerParams(
            dimension_semantics=("parallel",),
            vmem_limit_bytes=32 * 1024 * 1024,   # tiles use ~250 KiB << v7x budget
        ),
    )(w_mat, b_col, patches)

    conv_t = conv_t[:, :R]                                       # (out_ch, R)

    # Repack for routing: (out_ch=(ch_j, n_j), R=(B, ci, h, w)) -> (B, ci, n_j, M)
    conv6 = conv_t.reshape(ch_j, n_j, B, ci, h, wsp)
    x_r = jnp.transpose(conv6, (2, 3, 1, 0, 4, 5)).reshape(B, ci, n_j, ch_j * h * wsp)
    M = ch_j * h * wsp

    # ---------------- Pallas kernel 2: dynamic routing, grid over batch -------
    routed = pl.pallas_call(
        _make_routing_kernel(r_num),
        out_shape=jax.ShapeDtypeStruct((B, n_j, M), jnp.float32),
        grid_spec=pltpu.PrefetchScalarGridSpec(
            num_scalar_prefetch=0,
            grid=(B,),
            in_specs=[pl.BlockSpec((1, ci, n_j, M), lambda bb: (bb, 0, 0, 0))],
            out_specs=pl.BlockSpec((1, n_j, M), lambda bb: (bb, 0, 0)),
        ),
        compiler_params=pltpu.CompilerParams(
            dimension_semantics=("parallel",),
            vmem_limit_bytes=32 * 1024 * 1024,
        ),
    )(x_r)

    # (B, n_j, ch_j, H, W) -> (B, ch_j, n_j, H, W)  (matches torch output layout)
    out = routed.reshape(B, n_j, ch_j, h, wsp)
    return jnp.transpose(out, (0, 2, 1, 3, 4))


# ----------------------------------------------------------------------------
# Pure-JAX reference of the PyTorch module (independent path: XLA conv3d).
# ----------------------------------------------------------------------------
def _reference_forward(inputs, weight, bias, *, ch_j, n_j, r_num):
    B, ci, ni, h, wsp = inputs.shape
    x = inputs.reshape(B, ci * ni, h, wsp)[:, None]              # (B,1,D,H,W)
    y = jax.lax.conv_general_dilated(
        x, weight,
        window_strides=(ni, 1, 1),
        padding=((0, 0), (1, 1), (1, 1)),
        dimension_numbers=("NCDHW", "OIDHW", "NCDHW"),
        precision=jax.lax.Precision.HIGHEST)
    y = y + bias[None, :, None, None, None]
    width = y.shape[-1]
    y = jnp.transpose(y, (0, 2, 1, 3, 4))                        # (B, D, C, H, W)
    y = y.reshape(B, ci, ch_j, n_j, width, width)
    xr = jnp.transpose(y, (0, 4, 5, 3, 2, 1))                    # (B,W,W,n_j,ch_j,ci)

    Blog = jnp.zeros((B, width, width, 1, ch_j, ci), jnp.float32)
    S_hat = None
    for i in range(r_num):
        tmp = jnp.transpose(Blog, (0, 5, 3, 1, 2, 4)).reshape(B, ci, 1, width * width * ch_j)
        k = jax.nn.softmax(tmp, axis=-1)
        k = jnp.transpose(k.reshape(B, ci, 1, width, width, ch_j), (0, 3, 4, 2, 5, 1))
        S = jnp.sum(k * xr, axis=-1, keepdims=True)
        nrm = jnp.abs(S)                                         # norm over size-1 dim
        S_hat = nrm / (1.0 + nrm ** 2 + 1e-20) * S
        if i < r_num - 1:
            agr = jnp.sum(S_hat * xr, axis=3, keepdims=True)
            Blog = Blog + agr
    S_hat = S_hat[..., 0]                                        # (B,W,W,n_j,ch_j)
    return jnp.transpose(S_hat, (0, 4, 3, 1, 2))                 # (B,ch_j,n_j,W,W)


if __name__ == "__main__":
    # Small shapes: batch=2, ch_i=4 input capsule channels of dim n_i=4, 8x8 spatial,
    # ch_j=8 output capsule channels of dim n_j=4, 3 routing iterations.
    B, CH_I, N_I, H, W = 2, 4, 4, 8, 8
    CH_J, N_J, KSIZE, R_NUM = 8, 4, 3, 3
    OUT_CH = CH_J * N_J

    key = jax.random.PRNGKey(0)
    k1, k2, k3 = jax.random.split(key, 3)
    inputs = jax.random.normal(k1, (B, CH_I, N_I, H, W), dtype=jnp.float32)
    weight = jax.random.normal(k2, (OUT_CH, 1, KSIZE, KSIZE, KSIZE), dtype=jnp.float32) * 0.1
    bias = jax.random.normal(k3, (OUT_CH,), dtype=jnp.float32) * 0.1

    out = conv_caps_layer_3d(inputs, weight, bias,
                             ch_j=CH_J, n_j=N_J, kernel_size=KSIZE, r_num=R_NUM)
    out = jax.block_until_ready(out)

    ref = _reference_forward(inputs, weight, bias, ch_j=CH_J, n_j=N_J, r_num=R_NUM)
    ref = jax.block_until_ready(ref)

    assert out.shape == (B, CH_J, N_J, H, W), out.shape
    # Loose rtol tolerates MXU f32 matmul precision differences; structural bugs
    # (wrong permute / routing) would produce O(1) relative errors.
    assert jnp.allclose(out, ref, rtol=5e-2, atol=1e-8), (
        "max abs diff", float(jnp.max(jnp.abs(out - ref))))
    print("KERNEL_OK")
</pallas_src>

<mosaic_0001>
module attributes {stable_mosaic.version = 11 : i64} {
  func.func @_conv_mm_kernel(%arg0: i32, %arg1: memref<32x27xf32, #tpu.memory_space<vmem>>, %arg2: memref<32x1xf32, #tpu.memory_space<vmem>>, %arg3: memref<27x256xf32, #tpu.memory_space<vmem>>, %arg4: memref<32x256xf32, #tpu.memory_space<vmem>>) attributes {dimension_semantics = [#tpu.dimension_semantics<parallel>], iteration_bounds = array<i64: 2>, scalar_prefetch = 0 : i64, scratch_operands = 0 : i64, tpu.core_type = #tpu.core_type<tc>, window_params = [{pipeline_mode = #tpu.pipeline_mode<synchronous>, transform_indices = @transform_0, window_bounds = array<i64: 32, 27>}, {pipeline_mode = #tpu.pipeline_mode<synchronous>, transform_indices = @transform_1, window_bounds = array<i64: 32, 1>}, {transform_indices = @transform_2, window_bounds = array<i64: 27, 256>}, {transform_indices = @transform_3, window_bounds = array<i64: 32, 256>}]} {
    %c0 = arith.constant 0 : index
    %c0_0 = arith.constant 0 : index
    %0 = vector.load %arg1[%c0, %c0_0] : memref<32x27xf32, #tpu.memory_space<vmem>>, vector<32x27xf32>
    %c0_1 = arith.constant 0 : index
    %c0_2 = arith.constant 0 : index
    %1 = vector.load %arg3[%c0_1, %c0_2] : memref<27x256xf32, #tpu.memory_space<vmem>>, vector<27x256xf32>
    %cst = arith.constant dense<0.000000e+00> : vector<32x256xf32>
    %2 = tpu.matmul %0, %1, %cst {dimension_numbers = #tpu.dot_dimension_numbers<[1], [0], [0], [1], [0, 0, 1, 1], [], []>} : vector<32x27xf32>, vector<27x256xf32>, vector<32x256xf32> -> vector<32x256xf32>
    %c0_3 = arith.constant 0 : index
    %c0_4 = arith.constant 0 : index
    %3 = vector.load %arg2[%c0_3, %c0_4] : memref<32x1xf32, #tpu.memory_space<vmem>>, vector<32x1xf32>
    %4 = vector.broadcast %3 : vector<32x1xf32> to vector<32x256xf32>
    %5 = arith.addf %2, %4 : vector<32x256xf32>
    %c0_5 = arith.constant 0 : index
    %c0_6 = arith.constant 0 : index
    %6 = vector.load %arg4[%c0_5, %c0_6] : memref<32x256xf32, #tpu.memory_space<vmem>>, vector<32x256xf32>
    tpu.vector_store %arg4[%c0_5, %c0_6], %5 {strides = array<i32>} : memref<32x256xf32, #tpu.memory_space<vmem>>, vector<32x256xf32>,
    return
  }
  func.func @transform_0(%arg0: i32) -> (i32, i32) {
    %c0_i32 = arith.constant 0 : i32
    %c0_i32_0 = arith.constant 0 : i32
    %c0_i32_1 = arith.constant 0 : i32
    return %c0_i32, %c0_i32_0 : i32, i32
  }
  func.func @transform_1(%arg0: i32) -> (i32, i32) {
    %c0_i32 = arith.constant 0 : i32
    %c0_i32_0 = arith.constant 0 : i32
    %c0_i32_1 = arith.constant 0 : i32
    return %c0_i32, %c0_i32_0 : i32, i32
  }
  func.func @transform_2(%arg0: i32) -> (i32, i32) {
    %c0_i32 = arith.constant 0 : i32
    %c0_i32_0 = arith.constant 0 : i32
    return %c0_i32, %arg0 : i32, i32
  }
  func.func @transform_3(%arg0: i32) -> (i32, i32) {
    %c0_i32 = arith.constant 0 : i32
    %c0_i32_0 = arith.constant 0 : i32
    return %c0_i32, %arg0 : i32, i32
  }
}

module attributes {stable_mosaic.version = 11 : i64} {
  func.func @kernel(%arg0: i32, %arg1: memref<1x4x4x512xf32, #tpu.memory_space<vmem>>, %arg2: memref<1x4x512xf32, #tpu.memory_space<vmem>>) attributes {dimension_semantics = [#tpu.dimension_semantics<parallel>], iteration_bounds = array<i64: 2>, scalar_prefetch = 0 : i64, scratch_operands = 0 : i64, tpu.core_type = #tpu.core_type<tc>, window_params = [{transform_indices = @transform_0, window_bounds = array<i64: 1, 4, 4, 512>}, {transform_indices = @transform_1, window_bounds = array<i64: 1, 4, 512>}]} {
    %c0 = arith.constant 0 : index
    %c0_0 = arith.constant 0 : index
    %c0_1 = arith.constant 0 : index
    %c0_2 = arith.constant 0 : index
    %0 = vector.load %arg1[%c0, %c0_0, %c0_1, %c0_2] : memref<1x4x4x512xf32, #tpu.memory_space<vmem>>, vector<1x4x4x512xf32>
    %1 = vector.shape_cast %0 : vector<1x4x4x512xf32> to vector<4x4x512xf32>
    %cst = arith.constant 0.000000e+00 : f32
    %2 = vector.broadcast %cst : f32 to vector<4x1x512xf32>
    %cst_3 = arith.constant dense<0xFF800000> : vector<4x1xf32>
    %3 = vector.multi_reduction <maximumf>, %2, %cst_3 [2] : vector<4x1x512xf32> to vector<4x1xf32>
    %4 = vector.shape_cast %3 : vector<4x1xf32> to vector<4x1x1xf32>
    %5 = vector.broadcast %4 : vector<4x1x1xf32> to vector<4x1x512xf32>
    %6 = arith.subf %2, %5 : vector<4x1x512xf32>
    %7 = math.exp %6 : vector<4x1x512xf32>
    %cst_4 = arith.constant dense<0.000000e+00> : vector<4x1xf32>
    %8 = vector.multi_reduction <add>, %7, %cst_4 [2] : vector<4x1x512xf32> to vector<4x1xf32>
    %9 = vector.shape_cast %8 : vector<4x1xf32> to vector<4x1x1xf32>
    %10 = vector.broadcast %9 : vector<4x1x1xf32> to vector<4x1x512xf32>
    %11 = arith.divf %7, %10 : vector<4x1x512xf32>
    %12 = vector.broadcast %11 : vector<4x1x512xf32> to vector<4x4x512xf32>
    %13 = arith.mulf %12, %1 : vector<4x4x512xf32>
    %14 = vector.extract_strided_slice %13 {offsets = [0, 0, 0], sizes = [1, 4, 512], strides = [1, 1, 1]} : vector<4x4x512xf32> to vector<1x4x512xf32>
    %15 = vector.shape_cast %14 : vector<1x4x512xf32> to vector<4x512xf32>
    %16 = vector.extract_strided_slice %13 {offsets = [1, 0, 0], sizes = [1, 4, 512], strides = [1, 1, 1]} : vector<4x4x512xf32> to vector<1x4x512xf32>
    %17 = vector.shape_cast %16 : vector<1x4x512xf32> to vector<4x512xf32>
    %18 = arith.addf %15, %17 : vector<4x512xf32>
    %19 = vector.extract_strided_slice %13 {offsets = [2, 0, 0], sizes = [1, 4, 512], strides = [1, 1, 1]} : vector<4x4x512xf32> to vector<1x4x512xf32>
    %20 = vector.shape_cast %19 : vector<1x4x512xf32> to vector<4x512xf32>
    %21 = arith.addf %18, %20 : vector<4x512xf32>
    %22 = vector.extract_strided_slice %13 {offsets = [3, 0, 0], sizes = [1, 4, 512], strides = [1, 1, 1]} : vector<4x4x512xf32> to vector<1x4x512xf32>
    %23 = vector.shape_cast %22 : vector<1x4x512xf32> to vector<4x512xf32>
    %24 = arith.addf %21, %23 : vector<4x512xf32>
    %25 = math.absf %24 : vector<4x512xf32>
    %26 = arith.mulf %24, %24 : vector<4x512xf32>
    %cst_5 = arith.constant 1.000000e+00 : f32
    %27 = vector.broadcast %cst_5 : f32 to vector<4x512xf32>
    %28 = arith.addf %27, %26 : vector<4x512xf32>
    %cst_6 = arith.constant 9.99999968E-21 : f32
    %29 = vector.broadcast %cst_6 : f32 to vector<4x512xf32>
    %30 = arith.addf %28, %29 : vector<4x512xf32>
    %31 = arith.divf %25, %30 : vector<4x512xf32>
    %32 = arith.mulf %31, %24 : vector<4x512xf32>
    %33 = vector.shape_cast %32 : vector<4x512xf32> to vector<1x4x512xf32>
    %34 = vector.broadcast %33 : vector<1x4x512xf32> to vector<4x4x512xf32>
    %35 = arith.mulf %34, %1 : vector<4x4x512xf32>
    %36 = vector.extract_strided_slice %35 {offsets = [0, 0, 0], sizes = [4, 1, 512], strides = [1, 1, 1]} : vector<4x4x512xf32> to vector<4x1x512xf32>
    %37 = vector.extract_strided_slice %35 {offsets = [0, 1, 0], sizes = [4, 1, 512], strides = [1, 1, 1]} : vector<4x4x512xf32> to vector<4x1x512xf32>
    %38 = arith.addf %36, %37 : vector<4x1x512xf32>
    %39 = vector.extract_strided_slice %35 {offsets = [0, 2, 0], sizes = [4, 1, 512], strides = [1, 1, 1]} : vector<4x4x512xf32> to vector<4x1x512xf32>
    %40 = arith.addf %38, %39 : vector<4x1x512xf32>
    %41 = vector.extract_strided_slice %35 {offsets = [0, 3, 0], sizes = [4, 1, 512], strides = [1, 1, 1]} : vector<4x4x512xf32> to vector<4x1x512xf32>
    %42 = arith.addf %40, %41 : vector<4x1x512xf32>
    %43 = arith.addf %2, %42 : vector<4x1x512xf32>
    %cst_7 = arith.constant dense<0xFF800000> : vector<4x1xf32>
    %44 = vector.multi_reduction <maximumf>, %43, %cst_7 [2] : vector<4x1x512xf32> to vector<4x1xf32>
    %45 = vector.shape_cast %44 : vector<4x1xf32> to vector<4x1x1xf32>
    %46 = vector.broadcast %45 : vector<4x1x1xf32> to vector<4x1x512xf32>
    %47 = arith.subf %43, %46 : vector<4x1x512xf32>
    %48 = math.exp %47 : vector<4x1x512xf32>
    %cst_8 = arith.constant dense<0.000000e+00> : vector<4x1xf32>
    %49 = vector.multi_reduction <add>, %48, %cst_8 [2] : vector<4x1x512xf32> to vector<4x1xf32>
    %50 = vector.shape_cast %49 : vector<4x1xf32> to vector<4x1x1xf32>
    %51 = vector.broadcast %50 : vector<4x1x1xf32> to vector<4x1x512xf32>
    %52 = arith.divf %48, %51 : vector<4x1x512xf32>
    %53 = vector.broadcast %52 : vector<4x1x512xf32> to vector<4x4x512xf32>
    %54 = arith.mulf %53, %1 : vector<4x4x512xf32>
    %55 = vector.extract_strided_slice %54 {offsets = [0, 0, 0], sizes = [1, 4, 512], strides = [1, 1, 1]} : vector<4x4x512xf32> to vector<1x4x512xf32>
    %56 = vector.shape_cast %55 : vector<1x4x512xf32> to vector<4x512xf32>
    %57 = vector.extract_strided_slice %54 {offsets = [1, 0, 0], sizes = [1, 4, 512], strides = [1, 1, 1]} : vector<4x4x512xf32> to vector<1x4x512xf32>
    %58 = vector.shape_cast %57 : vector<1x4x512xf32> to vector<4x512xf32>
    %59 = arith.addf %56, %58 : vector<4x512xf32>
    %60 = vector.extract_strided_slice %54 {offsets = [2, 0, 0], sizes = [1, 4, 512], strides = [1, 1, 1]} : vector<4x4x512xf32> to vector<1x4x512xf32>
    %61 = vector.shape_cast %60 : vector<1x4x512xf32> to vector<4x512xf32>
    %62 = arith.addf %59, %61 : vector<4x512xf32>
    %63 = vector.extract_strided_slice %54 {offsets = [3, 0, 0], sizes = [1, 4, 512], strides = [1, 1, 1]} : vector<4x4x512xf32> to vector<1x4x512xf32>
    %64 = vector.shape_cast %63 : vector<1x4x512xf32> to vector<4x512xf32>
    %65 = arith.addf %62, %64 : vector<4x512xf32>
    %66 = math.absf %65 : vector<4x512xf32>
    %67 = arith.mulf %65, %65 : vector<4x512xf32>
    %cst_9 = arith.constant 1.000000e+00 : f32
    %68 = vector.broadcast %cst_9 : f32 to vector<4x512xf32>
    %69 = arith.addf %68, %67 : vector<4x512xf32>
    %cst_10 = arith.constant 9.99999968E-21 : f32
    %70 = vector.broadcast %cst_10 : f32 to vector<4x512xf32>
    %71 = arith.addf %69, %70 : vector<4x512xf32>
    %72 = arith.divf %66, %71 : vector<4x512xf32>
    %73 = arith.mulf %72, %65 : vector<4x512xf32>
    %74 = vector.shape_cast %73 : vector<4x512xf32> to vector<1x4x512xf32>
    %75 = vector.broadcast %74 : vector<1x4x512xf32> to vector<4x4x512xf32>
    %76 = arith.mulf %75, %1 : vector<4x4x512xf32>
    %77 = vector.extract_strided_slice %76 {offsets = [0, 0, 0], sizes = [4, 1, 512], strides = [1, 1, 1]} : vector<4x4x512xf32> to vector<4x1x512xf32>
    %78 = vector.extract_strided_slice %76 {offsets = [0, 1, 0], sizes = [4, 1, 512], strides = [1, 1, 1]} : vector<4x4x512xf32> to vector<4x1x512xf32>
    %79 = arith.addf %77, %78 : vector<4x1x512xf32>
    %80 = vector.extract_strided_slice %76 {offsets = [0, 2, 0], sizes = [4, 1, 512], strides = [1, 1, 1]} : vector<4x4x512xf32> to vector<4x1x512xf32>
    %81 = arith.addf %79, %80 : vector<4x1x512xf32>
    %82 = vector.extract_strided_slice %76 {offsets = [0, 3, 0], sizes = [4, 1, 512], strides = [1, 1, 1]} : vector<4x4x512xf32> to vector<4x1x512xf32>
    %83 = arith.addf %81, %82 : vector<4x1x512xf32>
    %84 = arith.addf %43, %83 : vector<4x1x512xf32>
    %cst_11 = arith.constant dense<0xFF800000> : vector<4x1xf32>
    %85 = vector.multi_reduction <maximumf>, %84, %cst_11 [2] : vector<4x1x512xf32> to vector<4x1xf32>
    %86 = vector.shape_cast %85 : vector<4x1xf32> to vector<4x1x1xf32>
    %87 = vector.broadcast %86 : vector<4x1x1xf32> to vector<4x1x512xf32>
    %88 = arith.subf %84, %87 : vector<4x1x512xf32>
    %89 = math.exp %88 : vector<4x1x512xf32>
    %cst_12 = arith.constant dense<0.000000e+00> : vector<4x1xf32>
    %90 = vector.multi_reduction <add>, %89, %cst_12 [2] : vector<4x1x512xf32> to vector<4x1xf32>
    %91 = vector.shape_cast %90 : vector<4x1xf32> to vector<4x1x1xf32>
    %92 = vector.broadcast %91 : vector<4x1x1xf32> to vector<4x1x512xf32>
    %93 = arith.divf %89, %92 : vector<4x1x512xf32>
    %94 = vector.broadcast %93 : vector<4x1x512xf32> to vector<4x4x512xf32>
    %95 = arith.mulf %94, %1 : vector<4x4x512xf32>
    %96 = vector.extract_strided_slice %95 {offsets = [0, 0, 0], sizes = [1, 4, 512], strides = [1, 1, 1]} : vector<4x4x512xf32> to vector<1x4x512xf32>
    %97 = vector.shape_cast %96 : vector<1x4x512xf32> to vector<4x512xf32>
    %98 = vector.extract_strided_slice %95 {offsets = [1, 0, 0], sizes = [1, 4, 512], strides = [1, 1, 1]} : vector<4x4x512xf32> to vector<1x4x512xf32>
    %99 = vector.shape_cast %98 : vector<1x4x512xf32> to vector<4x512xf32>
    %100 = arith.addf %97, %99 : vector<4x512xf32>
    %101 = vector.extract_strided_slice %95 {offsets = [2, 0, 0], sizes = [1, 4, 512], strides = [1, 1, 1]} : vector<4x4x512xf32> to vector<1x4x512xf32>
    %102 = vector.shape_cast %101 : vector<1x4x512xf32> to vector<4x512xf32>
    %103 = arith.addf %100, %102 : vector<4x512xf32>
    %104 = vector.extract_strided_slice %95 {offsets = [3, 0, 0], sizes = [1, 4, 512], strides = [1, 1, 1]} : vector<4x4x512xf32> to vector<1x4x512xf32>
    %105 = vector.shape_cast %104 : vector<1x4x512xf32> to vector<4x512xf32>
    %106 = arith.addf %103, %105 : vector<4x512xf32>
    %107 = math.absf %106 : vector<4x512xf32>
    %108 = arith.mulf %106, %106 : vector<4x512xf32>
    %cst_13 = arith.constant 1.000000e+00 : f32
    %109 = vector.broadcast %cst_13 : f32 to vector<4x512xf32>
    %110 = arith.addf %109, %108 : vector<4x512xf32>
    %cst_14 = arith.constant 9.99999968E-21 : f32
    %111 = vector.broadcast %cst_14 : f32 to vector<4x512xf32>
    %112 = arith.addf %110, %111 : vector<4x512xf32>
    %113 = arith.divf %107, %112 : vector<4x512xf32>
    %114 = arith.mulf %113, %106 : vector<4x512xf32>
    %115 = vector.shape_cast %114 : vector<4x512xf32> to vector<1x4x512xf32>
    %c0_15 = arith.constant 0 : index
    %c0_16 = arith.constant 0 : index
    %c0_17 = arith.constant 0 : index
    %116 = vector.load %arg2[%c0_15, %c0_16, %c0_17] : memref<1x4x512xf32, #tpu.memory_space<vmem>>, vector<1x4x512xf32>
    tpu.vector_store %arg2[%c0_15, %c0_16, %c0_17], %115 {strides = array<i32>} : memref<1x4x512xf32, #tpu.memory_space<vmem>>, vector<1x4x512xf32>,
    return
  }
  func.func @transform_0(%arg0: i32) -> (i32, i32, i32, i32) {
    %c0_i32 = arith.constant 0 : i32
    %c0_i32_0 = arith.constant 0 : i32
    %c0_i32_1 = arith.constant 0 : i32
    %c0_i32_2 = arith.constant 0 : i32
    return %arg0, %c0_i32, %c0_i32_0, %c0_i32_1 : i32, i32, i32, i32
  }
  func.func @transform_1(%arg0: i32) -> (i32, i32, i32) {
    %c0_i32 = arith.constant 0 : i32
    %c0_i32_0 = arith.constant 0 : i32
    %c0_i32_1 = arith.constant 0 : i32
    return %arg0, %c0_i32, %c0_i32_0 : i32, i32, i32
  }
}

</mosaic_0001>

<llo_original>
// kernel: conv_caps_layer_3d.2
$region0: #{conv_caps_layer_3d.2}
  #allocation0 [shape = 'u32[]', space=smem, size = 0x4, offset = 0x4, fixed_abs, tag = 'smem constant byte address 0x4 - core index']
  #allocation1 [shape = 'u32[144,128]{1,0:T(1,128)}', space=vmem, size = 0x12000, scoped, tag = 'internal scratch']
  %s0 = inlined_call_operand.vmem [shape: f32[32,27], index: 0, kind: input, shape index: {}]
  %s1 = inlined_call_operand.vmem [shape: f32[32,1], index: 1, kind: input, shape index: {}]
  %s2 = inlined_call_operand.vmem [shape: f32[27,512], index: 2, kind: input, shape index: {}]
  %s3 = inlined_call_operand.vmem [shape: f32[32,512], index: 3, kind: output, shape index: {}]
  %s4 = sld [smem:[#allocation0]]
  $region87: #{conv_caps_layer_3d.2} parent=0
    _
  %s6 = ssub.s32 1, %s4
  %s7 = scalar_select 0, %s6, %s4
  $region1: #{conv_caps_layer_3d.2} parent=0
    #allocation2 [shape = 'u8[65536]{0}', space=vmem, size = 0x10000, scoped, tag = 'input window, operand 2']
    #allocation3 [shape = 'u8[65536]{0}', space=vmem, size = 0x10000, scoped, tag = 'output window, operand 0']
    loop: start=0, step=1, limit=4
    $region2: #{conv_caps_layer_3d.2} parent=1 // loop_pre_header
      _
    $region3: #{conv_caps_layer_3d.2} parent=1 // loop_header
      %s9 = sphi 0, %s13
      %p10 = scmp.ge.s32.totalorder %s9, 4
      %s17 = sphi 0, %s17
      %s19 = sphi 0, %s17
      %s20 = sphi 0, %s19
      %s34 = sphi 0, %s20
      %s38 = sphi 0, %s38
      %s40 = sphi 0, %s38
      %s41 = sphi 0, %s40
      %s55 = sphi 0, %s41
      %s61 = sphi 0, %s63
      %s64 = sphi 0, %s61
      %s65 = sphi 0, %s64
      %s81 = sphi 0, %s65
      %s87 = sphi 0, %s89
      %s90 = sphi 0, %s87
      %s91 = sphi 0, %s90
      %s107 = sphi 0, %s91
    $region4: #{conv_caps_layer_3d.2} parent=1 // loop_header_branch
      %12 = sbr.rel (%p10) target = $region8
    $region5: #{conv_caps_layer_3d.2} parent=1 // loop_body
      %s14 = ssub.s32 %s9, 1
      %s15 = ssub.s32 %s9, 2
      %s16 = sadd.s32 %s9, 1
      %s18 = sadd.s32 %s17, 1
      %p21 = scmp.eq.s32.totalorder %s9, 1
      %p22 = scmp.ne.s32.totalorder %s17, %s19
      %p23 = scmp.eq.s32.totalorder %s9, 0
      %p24 = por %p22, %p23
      %p25 = scmp.ne.s32.totalorder %s17, %s19
      %p26 = scmp.eq.s32.totalorder %s14, 1
      %p27 = por %p25, %p26
      %p28 = scmp.ne.s32.totalorder %s19, %s20
      %p29 = scmp.eq.s32.totalorder %s14, 0
      %p30 = por %p28, %p29
      %p31 = scmp.ne.s32.totalorder %s19, %s20
      %p32 = scmp.eq.s32.totalorder %s15, 1
      %p33 = por %p31, %p32
      %p35 = scmp.ne.s32.totalorder %s20, %s34
      %p36 = scmp.eq.s32.totalorder %s15, 0
      %p37 = por %p35, %p36
      %s39 = sadd.s32 %s38, 1
      %p42 = scmp.eq.s32.totalorder %s9, 1
      %p43 = scmp.ne.s32.totalorder %s38, %s40
      %p44 = scmp.eq.s32.totalorder %s9, 0
      %p45 = por %p43, %p44
      %p46 = scmp.ne.s32.totalorder %s38, %s40
      %p47 = scmp.eq.s32.totalorder %s14, 1
      %p48 = por %p46, %p47
      %p49 = scmp.ne.s32.totalorder %s40, %s41
      %p50 = scmp.eq.s32.totalorder %s14, 0
      %p51 = por %p49, %p50
      %p52 = scmp.ne.s32.totalorder %s40, %s41
      %p53 = scmp.eq.s32.totalorder %s15, 1
      %p54 = por %p52, %p53
      %p56 = scmp.ne.s32.totalorder %s41, %s55
      %p57 = scmp.eq.s32.totalorder %s15, 0
      %p58 = por %p56, %p57
      %s59 = ssub.s32 %s9, %s16
      %p60 = scmp.eq.s32.totalorder %s59, 0
      %s62 = sadd.s32 %s61, 1
      %s63 = scalar_select %p60, %s61, %s62
      %p66 = pneg %p60
      %p67 = scmp.eq.s32.totalorder %s9, 1
      %p68 = por %p66, %p67
      %p69 = scmp.ne.s32.totalorder %s61, %s64
      %p70 = scmp.eq.s32.totalorder %s9, 0
      %p71 = por %p69, %p70
      %p72 = scmp.ne.s32.totalorder %s61, %s64
      %p73 = scmp.eq.s32.totalorder %s14, 1
      %p74 = por %p72, %p73
      %p75 = scmp.ne.s32.totalorder %s64, %s65
      %p76 = scmp.eq.s32.totalorder %s14, 0
      %p77 = por %p75, %p76
      %p78 = scmp.ne.s32.totalorder %s64, %s65
      %p79 = scmp.eq.s32.totalorder %s15, 1
      %p80 = por %p78, %p79
      %p82 = scmp.ne.s32.totalorder %s65, %s81
      %p83 = scmp.eq.s32.totalorder %s15, 0
      %p84 = por %p82, %p83
      %s85 = ssub.s32 %s9, %s16
      %p86 = scmp.eq.s32.totalorder %s85, 0
      %s88 = sadd.s32 %s87, 1
      %s89 = scalar_select %p86, %s87, %s88
      %p92 = pneg %p86
      %p93 = scmp.eq.s32.totalorder %s9, 1
      %p94 = por %p92, %p93
      %p95 = scmp.ne.s32.totalorder %s87, %s90
      %p96 = scmp.eq.s32.totalorder %s9, 0
      %p97 = por %p95, %p96
      %p98 = scmp.ne.s32.totalorder %s87, %s90
      %p99 = scmp.eq.s32.totalorder %s14, 1
      %p100 = por %p98, %p99
      %p101 = scmp.ne.s32.totalorder %s90, %s91
      %p102 = scmp.eq.s32.totalorder %s14, 0
      %p103 = por %p101, %p102
      %p104 = scmp.ne.s32.totalorder %s90, %s91
      %p105 = scmp.eq.s32.totalorder %s15, 1
      %p106 = por %p104, %p105
      %p108 = scmp.ne.s32.totalorder %s91, %s107
      %p109 = scmp.eq.s32.totalorder %s15, 0
      %p110 = por %p108, %p109
      %p111 = scmp.le.s32.totalorder 1, %s9
      %p112 = scmp.lt.s32.totalorder %s9, 3
      %p113 = pnand %p111, %p112
      %p114 = pneg %p113
      // Predicated region
      $region9: #{conv_caps_layer_3d.2} parent=5 // pred_check
        _
      $region10: #{conv_caps_layer_3d.2} parent=5 // pred_check_branch
        %116 = sbr.rel (%p113) target = $region12
      $region11: #{conv_caps_layer_3d.2} parent=5 // pred_region
        %s117 = ssub.s32 %s9, 1
        // Predicated region
        $region13: #{conv_caps_layer_3d.2} parent=11 // pred_check
          %p118 = pneg %p30
        $region14: #{conv_caps_layer_3d.2} parent=11 // pred_check_branch
          %120 = sbr.rel (%p118) target = $region16
        $region15: #{conv_caps_layer_3d.2} parent=11 // pred_region
          _
        $region16: #{conv_caps_layer_3d.2} parent=11 // pred_fallthru
          _
        // Predicated region
        $region17: #{conv_caps_layer_3d.2} parent=11 // pred_check
          %p121 = pneg %p51
        $region18: #{conv_caps_layer_3d.2} parent=11 // pred_check_branch
          %123 = sbr.rel (%p121) target = $region20
        $region19: #{conv_caps_layer_3d.2} parent=11 // pred_region
          _
        $region20: #{conv_caps_layer_3d.2} parent=11 // pred_fallthru
          _
      $region12: #{conv_caps_layer_3d.2} parent=5 // pred_fallthru
        _
      %p124 = scmp.lt.s32.totalorder %s9, 2
      // Predicated region
      $region21: #{conv_caps_layer_3d.2} parent=5 // pred_check
        %p125 = pneg %p124
      $region22: #{conv_caps_layer_3d.2} parent=5 // pred_check_branch
        %127 = sbr.rel (%p125) target = $region24
      $region23: #{conv_caps_layer_3d.2} parent=5 // pred_region
        // Predicated region
        $region25: #{conv_caps_layer_3d.2} parent=23 // pred_check
          %p128 = pneg %p71
        $region26: #{conv_caps_layer_3d.2} parent=23 // pred_check_branch
          %130 = sbr.rel (%p128) target = $region28
        $region27: #{conv_caps_layer_3d.2} parent=23 // pred_region
          %s131 = sand.u32 %s61, 1
          %s132 = sand.u32 %s61, 1
          %s133 = smul.addr %s132, 64
          %s134 = scalar_lea.vmem [#allocation2], %s133
          %s135 = smul.u32 2, %s9
          %s136 = smul.addr %s135, 8
          %s137 = scalar_lea.vmem %s2, %s136
          // Predicated region
          $region29: #{conv_caps_layer_3d.2} parent=27 // pred_check
            _
          $region30: #{conv_caps_layer_3d.2} parent=27 // pred_check_branch
            %139 = sbr.rel (0) target = $region32
          $region31: #{conv_caps_layer_3d.2} parent=27 // pred_region
            // Predicated region
            $region33: #{conv_caps_layer_3d.2} parent=31 // pred_check
              _
            $region34: #{conv_caps_layer_3d.2} parent=31 // pred_check_branch
              %141 = sbr.rel (0) target = $region36
            $region35: #{conv_caps_layer_3d.2} parent=31 // pred_region
              loop: start=0, step=1, limit=1
              $region37: #{conv_caps_layer_3d.2} parent=35 // loop_pre_header
                _
              $region38: #{conv_caps_layer_3d.2} parent=35 // loop_header
                %s143 = sphi 0, %s147
                %p144 = scmp.ge.s32.totalorder %s143, 1
                %s148 = sphi %s137, %s137
                %s149 = sphi %s134, %s134
              $region39: #{conv_caps_layer_3d.2} parent=35 // loop_header_branch
                %146 = sbr.rel (%p144) target = $region43
              $region40: #{conv_caps_layer_3d.2} parent=35 // loop_body
                %v150 = vld [vmem:[%s148] sm:$0xff]
                %151 = vst [vmem:[%s149] sm:$0xff] %v150
                %v152 = vld [vmem:[%s148 + $0x8] sm:$0xff]
                %153 = vst [vmem:[%s149 + $0x8] sm:$0xff] %v152
                %v154 = vld [vmem:[%s148 + $0x20] sm:$0xff]
                %155 = vst [vmem:[%s149 + $0x10] sm:$0xff] %v154
                %v156 = vld [vmem:[%s148 + $0x28] sm:$0xff]
                %157 = vst [vmem:[%s149 + $0x18] sm:$0xff] %v156
                %v158 = vld [vmem:[%s148 + $0x40] sm:$0xff]
                %159 = vst [vmem:[%s149 + $0x20] sm:$0xff] %v158
                %v160 = vld [vmem:[%s148 + $0x48] sm:$0xff]
                %161 = vst [vmem:[%s149 + $0x28] sm:$0xff] %v160
                %v162 = vld [vmem:[%s148 + $0x60] sm:$0xff]
                %163 = vst [vmem:[%s149 + $0x30] sm:$0xff] %v162
                %v164 = vld [vmem:[%s148 + $0x68] sm:$0xff]
                %165 = vst [vmem:[%s149 + $0x38] sm:$0xff] %v164
              $region41: #{conv_caps_layer_3d.2} parent=35 // loop_footer
                %s147 = sadd.s32 1, %s143
              $region42: #{conv_caps_layer_3d.2} parent=35 // loop_footer_branch
                %142 = sbr.rel target = $region38
              $region43: #{conv_caps_layer_3d.2} parent=35 // loop_exit
                _
            $region36: #{conv_caps_layer_3d.2} parent=31 // pred_fallthru
              _
            // Predicated region
            $region44: #{conv_caps_layer_3d.2} parent=31 // pred_check
              _
            $region45: #{conv_caps_layer_3d.2} parent=31 // pred_check_branch
              %167 = sbr.rel target = $region47
            $region46: #{conv_caps_layer_3d.2} parent=31 // pred_region
              _
            $region47: #{conv_caps_layer_3d.2} parent=31 // pred_fallthru
              _
          $region32: #{conv_caps_layer_3d.2} parent=27 // pred_fallthru
            _
          %168 = vnop
        $region28: #{conv_caps_layer_3d.2} parent=23 // pred_fallthru
          _
      $region24: #{conv_caps_layer_3d.2} parent=5 // pred_fallthru
        _
      %p169 = scmp.le.s32.totalorder 1, %s9
      %p170 = scmp.lt.s32.totalorder %s9, 3
      %p171 = pnand %p169, %p170
      %p172 = pneg %p171
      // Predicated region
      $region48: #{conv_caps_layer_3d.2} parent=5 // pred_check
        _
      $region49: #{conv_caps_layer_3d.2} parent=5 // pred_check_branch
        %174 = sbr.rel (%p171) target = $region51
      $region50: #{conv_caps_layer_3d.2} parent=5 // pred_region
        %s175 = ssub.s32 %s9, 1
        %s176 = sand.u32 %s64, 1
        %s177 = sand.u32 %s64, 1
        %s178 = smul.addr %s177, 64
        %s179 = scalar_lea.vmem [#allocation2], %s178
        // Predicated region
        $region52: #{conv_caps_layer_3d.2} parent=50 // pred_check
          %p180 = pneg %p77
        $region53: #{conv_caps_layer_3d.2} parent=50 // pred_check_branch
          %182 = sbr.rel (%p180) target = $region55
        $region54: #{conv_caps_layer_3d.2} parent=50 // pred_region
          _
        $region55: #{conv_caps_layer_3d.2} parent=50 // pred_fallthru
          _
        %p183 = pneg %p30
        %p184 = pneg %p27
        %p185 = pneg %p51
        %p186 = pneg %p48
        %s187 = sand.u32 %s64, 1
        %s188 = sand.u32 %s64, 1
        %s189 = smul.addr %s188, 64
        %s190 = scalar_lea.vmem [#allocation2], %s189
        %p191 = pneg %p77
        %p192 = pneg %p74
        %p193 = pneg %p103
        %p194 = pneg %p100
        %s195 = sand.u32 %s90, 1
        %s196 = sand.u32 %s90, 1
        %s197 = smul.addr %s196, 64
        %s198 = scalar_lea.vmem [#allocation3], %s197
        %s199 = smul.u32 2, %s14
        %s200 = smul.u32 2, %s14
        %v201 = vld [vmem:[%s0] sm:$0xff]
        %v202 = vld [vmem:[%s0 + $0x8] sm:$0xff]
        %v203 = vld [vmem:[%s0 + $0x10] sm:$0xff]
        %v204 = vld [vmem:[%s0 + $0x18] sm:$0xff]
        %v205 = vld [vmem:[%s179] sm:$0xff]
        %v206 = vld [vmem:[%s179 + $0x8] sm:$0xff]
        %v207 = vld [vmem:[%s179 + $0x10] sm:$0xff]
        %v208 = vld [vmem:[%s179 + $0x18] sm:$0xff]
        %v209 = vld [vmem:[%s179 + $0x20] sm:$0xff]
        %v210 = vld [vmem:[%s179 + $0x28] sm:$0xff]
        %v211 = vld [vmem:[%s179 + $0x30] sm:$0x7]
        %v212 = vld [vmem:[%s179 + $0x38] sm:$0x7]
        %v213 = vld [vmem:[%s1] sm:$0xff]
        %v214 = vld [vmem:[%s1 + $0x8] sm:$0xff]
        %v215 = vld [vmem:[%s1 + $0x10] sm:$0xff]
        %v216 = vld [vmem:[%s1 + $0x18] sm:$0xff]
        %218 = vset.pattern.permute.xlu0 0
        %219 = vperm.xlu0 %218, %v213
        %v220 = vpop.permute.xlu0 %219
        %223 = vset.pattern.permute.xlu0 0
        %224 = vperm.xlu0 %223, %v214
        %v225 = vpop.permute.xlu0 %224
        %228 = vset.pattern.permute.xlu0 0
        %229 = vperm.xlu0 %228, %v215
        %v230 = vpop.permute.xlu0 %229
        %233 = vset.pattern.permute.xlu0 0
        %234 = vperm.xlu0 %233, %v216
        %v235 = vpop.permute.xlu0 %234
        %vm237 = vcmask 220160
        %v239 = vsel %vm237, %v201, 0
        %v242 = vsel %vm237, %v202, 0
        %v245 = vsel %vm237, %v203, 0
        %v248 = vsel %vm237, %v204, 0
        %vm250 = vcmask 1042432
        %v252 = vsel %vm250, %v211, 0
        %v255 = vsel %vm250, %v212, 0
        %257 = vmatprep.subr.mxu0 %v206
        %258 = vmatpush1.msra.mxu0 %v205
        %259 = vmatprep.subr.mxu0 %v208
        %260 = vmatpush1.msra.mxu0 %v207
        %261 = vmatprep.subr.mxu0 %v210
        %262 = vmatpush1.msra.mxu0 %v209
        %263 = vmatprep.subr.mxu0 %v255
        %264 = vmatpush1.msra.mxu0 %v252
        %265 = vmatprep.subr.mxu0 0.0
        %266 = vmatpush1.msra.mxu0 0.0
        %267 = vmatprep.subr.mxu0 0.0
        %268 = vmatpush1.msra.mxu0 0.0
        %269 = vmatprep.subr.mxu0 0.0
        %270 = vmatpush1.msra.mxu0 0.0
        %271 = vmatprep.subr.mxu0 0.0
        %272 = vmatpush1.msra.mxu0 0.0
        %273 = vmatprep.subr.mxu0 0.0
        %274 = vmatpush1.msra.mxu0 0.0
        %275 = vmatprep.subr.mxu0 0.0
        %276 = vmatpush1.msra.mxu0 0.0
        %277 = vmatprep.subr.mxu0 0.0
        %278 = vmatpush1.msra.mxu0 0.0
        %279 = vmatprep.subr.mxu0 0.0
        %280 = vmatpush1.msra.mxu0 0.0
        %281 = vmatprep.subr.mxu0 0.0
        %282 = vmatpush1.msra.mxu0 0.0
        %283 = vmatprep.subr.mxu0 0.0
        %284 = vmatpush1.msra.mxu0 0.0
        %285 = vmatprep.subr.mxu0 0.0
        %286 = vmatpush1.msra.mxu0 0.0
        %287 = vmatprep.subr.mxu0 0.0
        %288 = vmatpush1.msra.mxu0 0.0
        %289 = vmatprep.subr.mxu0 0.0
        %290 = vmatpush1.msra.mxu0 0.0
        %291 = vmatprep.subr.mxu0 0.0
        %292 = vmatpush1.msra.mxu0 0.0
        %293 = vmatprep.subr.mxu0 0.0
        %294 = vmatpush1.msra.mxu0 0.0
        %295 = vmatprep.subr.mxu0 0.0
        %296 = vmatpush1.msra.mxu0 0.0
        %297 = vmatprep.subr.mxu0 0.0
        %298 = vmatpush1.msra.mxu0 0.0
        %299 = vmatprep.subr.mxu0 0.0
        %300 = vmatpush1.msra.mxu0 0.0
        %301 = vmatprep.subr.mxu0 0.0
        %302 = vmatpush1.msra.mxu0 0.0
        %303 = vmatprep.subr.mxu0 0.0
        %304 = vmatpush1.msra.mxu0 0.0
        %305 = vmatprep.subr.mxu0 0.0
        %306 = vmatpush1.msra.mxu0 0.0
        %307 = vmatprep.subr.mxu0 0.0
        %308 = vmatpush1.msra.mxu0 0.0
        %309 = vmatprep.subr.mxu0 0.0
        %310 = vmatpush1.msra.mxu0 0.0
        %311 = vmatprep.subr.mxu0 0.0
        %312 = vmatpush1.msra.mxu0 0.0
        %313 = vmatprep.subr.mxu0 0.0
        %314 = vmatpush1.msra.mxu0 0.0
        %315 = vmatprep.subr.mxu0 0.0
        %316 = vmatpush1.msra.mxu0 0.0
        %317 = vmatprep.subr.mxu0 0.0
        %318 = vmatpush1.msra.mxu0 0.0
        %319 = vmatprep.subr.mxu0 0.0
        %320 = vmatpush1.msra.mxu0 0.0
        %321 = vmatprep.mubr.f32.mxu0 0.0
        %322 = vmatmul.mubr.f32.gmra.mrb[0].mxu0 %v239
        %v323 = vpop.f32.mrb[0].mxu0
        %v324 = vadd.f32 %v220, %v323
        %v325 = vpop.f32.mrb[0].mxu0
        %v326 = vadd.f32 %v220, %v325
        %327 = vmatprep.mubr.f32.mxu0 0.0
        %328 = vmatmul.mubr.f32.gmra.mrb[0].mxu0 %v242
        %v329 = vpop.f32.mrb[0].mxu0
        %v330 = vadd.f32 %v225, %v329
        %v331 = vpop.f32.mrb[0].mxu0
        %v332 = vadd.f32 %v225, %v331
        %333 = vmatprep.mubr.f32.mxu0 0.0
        %334 = vmatmul.mubr.f32.gmra.mrb[0].mxu0 %v245
        %v335 = vpop.f32.mrb[0].mxu0
        %v336 = vadd.f32 %v230, %v335
        %v337 = vpop.f32.mrb[0].mxu0
        %v338 = vadd.f32 %v230, %v337
        %339 = vmatprep.mubr.f32.mxu0 0.0
        %340 = vmatmul.mubr.f32.gmra.mrb[0].mxu0 %v248
        %v341 = vpop.f32.mrb[0].mxu0
        %v342 = vadd.f32 %v235, %v341
        %v343 = vpop.f32.mrb[0].mxu0
        %v344 = vadd.f32 %v235, %v343
        %345 = vdwg.mxu0
        %346 = vst [vmem:[%s198] sm:$0xff] %v324
        %347 = vst [vmem:[%s198 + $0x8] sm:$0xff] %v326
        %348 = vst [vmem:[%s198 + $0x10] sm:$0xff] %v330
        %349 = vst [vmem:[%s198 + $0x18] sm:$0xff] %v332
        %350 = vst [vmem:[%s198 + $0x20] sm:$0xff] %v336
        %351 = vst [vmem:[%s198 + $0x28] sm:$0xff] %v338
        %352 = vst [vmem:[%s198 + $0x30] sm:$0xff] %v342
        %353 = vst [vmem:[%s198 + $0x38] sm:$0xff] %v344
        %s354 = sand.u32 %s90, 1
        %s355 = sand.u32 %s90, 1
        %s356 = smul.addr %s355, 64
        %s357 = scalar_lea.vmem [#allocation3], %s356
        // Predicated region
        $region56: #{conv_caps_layer_3d.2} parent=50 // pred_check
          %p358 = pneg %p100
        $region57: #{conv_caps_layer_3d.2} parent=50 // pred_check_branch
          %360 = sbr.rel (%p358) target = $region59
        $region58: #{conv_caps_layer_3d.2} parent=50 // pred_region
          %s361 = smul.u32 2, %s14
          %s362 = smul.addr %s361, 8
          %s363 = scalar_lea.vmem %s3, %s362
          // Predicated region
          $region60: #{conv_caps_layer_3d.2} parent=58 // pred_check
            _
          $region61: #{conv_caps_layer_3d.2} parent=58 // pred_check_branch
            %365 = sbr.rel (0) target = $region63
          $region62: #{conv_caps_layer_3d.2} parent=58 // pred_region
            // Predicated region
            $region64: #{conv_caps_layer_3d.2} parent=62 // pred_check
              _
            $region65: #{conv_caps_layer_3d.2} parent=62 // pred_check_branch
              %367 = sbr.rel (0) target = $region67
            $region66: #{conv_caps_layer_3d.2} parent=62 // pred_region
              loop: start=0, step=1, limit=1
              $region68: #{conv_caps_layer_3d.2} parent=66 // loop_pre_header
                _
              $region69: #{conv_caps_layer_3d.2} parent=66 // loop_header
                %s369 = sphi 0, %s373
                %p370 = scmp.ge.s32.totalorder %s369, 1
                %s374 = sphi %s357, %s357
                %s375 = sphi %s363, %s363
              $region70: #{conv_caps_layer_3d.2} parent=66 // loop_header_branch
                %372 = sbr.rel (%p370) target = $region74
              $region71: #{conv_caps_layer_3d.2} parent=66 // loop_body
                %v376 = vld [vmem:[%s374] sm:$0xff]
                %377 = vst [vmem:[%s375] sm:$0xff] %v376
                %v378 = vld [vmem:[%s374 + $0x8] sm:$0xff]
                %379 = vst [vmem:[%s375 + $0x8] sm:$0xff] %v378
                %v380 = vld [vmem:[%s374 + $0x10] sm:$0xff]
                %381 = vst [vmem:[%s375 + $0x20] sm:$0xff] %v380
                %v382 = vld [vmem:[%s374 + $0x18] sm:$0xff]
                %383 = vst [vmem:[%s375 + $0x28] sm:$0xff] %v382
                %v384 = vld [vmem:[%s374 + $0x20] sm:$0xff]
                %385 = vst [vmem:[%s375 + $0x40] sm:$0xff] %v384
                %v386 = vld [vmem:[%s374 + $0x28] sm:$0xff]
                %387 = vst [vmem:[%s375 + $0x48] sm:$0xff] %v386
                %v388 = vld [vmem:[%s374 + $0x30] sm:$0xff]
                %389 = vst [vmem:[%s375 + $0x60] sm:$0xff] %v388
                %v390 = vld [vmem:[%s374 + $0x38] sm:$0xff]
                %391 = vst [vmem:[%s375 + $0x68] sm:$0xff] %v390
              $region72: #{conv_caps_layer_3d.2} parent=66 // loop_footer
                %s373 = sadd.s32 1, %s369
              $region73: #{conv_caps_layer_3d.2} parent=66 // loop_footer_branch
                %368 = sbr.rel target = $region69
              $region74: #{conv_caps_layer_3d.2} parent=66 // loop_exit
                _
            $region67: #{conv_caps_layer_3d.2} parent=62 // pred_fallthru
              _
            // Predicated region
            $region75: #{conv_caps_layer_3d.2} parent=62 // pred_check
              _
            $region76: #{conv_caps_layer_3d.2} parent=62 // pred_check_branch
              %393 = sbr.rel target = $region78
            $region77: #{conv_caps_layer_3d.2} parent=62 // pred_region
              _
            $region78: #{conv_caps_layer_3d.2} parent=62 // pred_fallthru
              _
          $region63: #{conv_caps_layer_3d.2} parent=58 // pred_fallthru
            _
          %394 = vnop
        $region59: #{conv_caps_layer_3d.2} parent=50 // pred_fallthru
          _
      $region51: #{conv_caps_layer_3d.2} parent=5 // pred_fallthru
        _
      %p395 = scmp.le.s32.totalorder 2, %s9
      // Predicated region
      $region79: #{conv_caps_layer_3d.2} parent=5 // pred_check
        %p396 = pneg %p395
      $region80: #{conv_caps_layer_3d.2} parent=5 // pred_check_branch
        %398 = sbr.rel (%p396) target = $region82
      $region81: #{conv_caps_layer_3d.2} parent=5 // pred_region
        %s399 = ssub.s32 %s9, 2
        // Predicated region
        $region83: #{conv_caps_layer_3d.2} parent=81 // pred_check
          %p400 = pneg %p106
        $region84: #{conv_caps_layer_3d.2} parent=81 // pred_check_branch
          %402 = sbr.rel (%p400) target = $region86
        $region85: #{conv_caps_layer_3d.2} parent=81 // pred_region
          %s403 = sand.u32 %s91, 1
          %s404 = sand.u32 %s91, 1
          %s405 = smul.addr %s404, 64
          %s406 = scalar_lea.vmem [#allocation3], %s405
        $region86: #{conv_caps_layer_3d.2} parent=81 // pred_fallthru
          _
      $region82: #{conv_caps_layer_3d.2} parent=5 // pred_fallthru
        _
    $region6: #{conv_caps_layer_3d.2} parent=1 // loop_footer
      %s13 = sadd.s32 1, %s9
    $region7: #{conv_caps_layer_3d.2} parent=1 // loop_footer_branch
      %8 = sbr.rel target = $region3
    $region8: #{conv_caps_layer_3d.2} parent=1 // loop_exit
      _

// kernel: conv_caps_layer_3d.3
$region0: #{conv_caps_layer_3d.3}
  #allocation0 [shape = 'u32[]', space=smem, size = 0x4, offset = 0x4, fixed_abs, tag = 'smem constant byte address 0x4 - core index']
  #allocation1 [shape = 'u32[144,128]{1,0:T(1,128)}', space=vmem, size = 0x12000, scoped, tag = 'internal scratch']
  %s0 = inlined_call_operand.vmem [shape: f32[2,4,4,512], index: 0, kind: input, shape index: {}]
  %s1 = inlined_call_operand.vmem [shape: f32[2,4,512], index: 1, kind: output, shape index: {}]
  %s2 = sld [smem:[#allocation0]]
  $region37: #{conv_caps_layer_3d.3} parent=0
    _
  %s4 = ssub.s32 1, %s2
  %s5 = scalar_select 0, %s4, %s2
  loop: start=0, step=1, limit=4
  $region2: #{conv_caps_layer_3d.3} parent=0 // loop_pre_header
    _
  $region3: #{conv_caps_layer_3d.3} parent=0 // loop_header
    %s7 = sphi 0, %s11
    %p8 = scmp.ge.s32.totalorder %s7, 4
    %s17 = sphi 0, %s19
    %s20 = sphi 0, %s17
    %s21 = sphi 0, %s20
    %s37 = sphi 0, %s21
    %s43 = sphi 0, %s45
    %s46 = sphi 0, %s43
    %s47 = sphi 0, %s46
    %s63 = sphi 0, %s47
  $region4: #{conv_caps_layer_3d.3} parent=0 // loop_header_branch
    %10 = sbr.rel (%p8) target = $region8
  $region5: #{conv_caps_layer_3d.3} parent=0 // loop_body
    %s12 = ssub.s32 %s7, 1
    %s13 = ssub.s32 %s7, 2
    %s14 = sadd.s32 %s7, 1
    %s15 = ssub.s32 %s7, %s14
    %p16 = scmp.eq.s32.totalorder %s15, 0
    %s18 = sadd.s32 %s17, 1
    %s19 = scalar_select %p16, %s17, %s18
    %p22 = pneg %p16
    %p23 = scmp.eq.s32.totalorder %s7, 1
    %p24 = por %p22, %p23
    %p25 = scmp.ne.s32.totalorder %s17, %s20
    %p26 = scmp.eq.s32.totalorder %s7, 0
    %p27 = por %p25, %p26
    %p28 = scmp.ne.s32.totalorder %s17, %s20
    %p29 = scmp.eq.s32.totalorder %s12, 1
    %p30 = por %p28, %p29
    %p31 = scmp.ne.s32.totalorder %s20, %s21
    %p32 = scmp.eq.s32.totalorder %s12, 0
    %p33 = por %p31, %p32
    %p34 = scmp.ne.s32.totalorder %s20, %s21
    %p35 = scmp.eq.s32.totalorder %s13, 1
    %p36 = por %p34, %p35
    %p38 = scmp.ne.s32.totalorder %s21, %s37
    %p39 = scmp.eq.s32.totalorder %s13, 0
    %p40 = por %p38, %p39
    %s41 = ssub.s32 %s7, %s14
    %p42 = scmp.eq.s32.totalorder %s41, 0
    %s44 = sadd.s32 %s43, 1
    %s45 = scalar_select %p42, %s43, %s44
    %p48 = pneg %p42
    %p49 = scmp.eq.s32.totalorder %s7, 1
    %p50 = por %p48, %p49
    %p51 = scmp.ne.s32.totalorder %s43, %s46
    %p52 = scmp.eq.s32.totalorder %s7, 0
    %p53 = por %p51, %p52
    %p54 = scmp.ne.s32.totalorder %s43, %s46
    %p55 = scmp.eq.s32.totalorder %s12, 1
    %p56 = por %p54, %p55
    %p57 = scmp.ne.s32.totalorder %s46, %s47
    %p58 = scmp.eq.s32.totalorder %s12, 0
    %p59 = por %p57, %p58
    %p60 = scmp.ne.s32.totalorder %s46, %s47
    %p61 = scmp.eq.s32.totalorder %s13, 1
    %p62 = por %p60, %p61
    %p64 = scmp.ne.s32.totalorder %s47, %s63
    %p65 = scmp.eq.s32.totalorder %s13, 0
    %p66 = por %p64, %p65
    %p67 = scmp.le.s32.totalorder 1, %s7
    %p68 = scmp.lt.s32.totalorder %s7, 3
    %p69 = pnand %p67, %p68
    %p70 = pneg %p69
    // Predicated region
    $region9: #{conv_caps_layer_3d.3} parent=5 // pred_check
      _
    $region10: #{conv_caps_layer_3d.3} parent=5 // pred_check_branch
      %72 = sbr.rel (%p69) target = $region12
    $region11: #{conv_caps_layer_3d.3} parent=5 // pred_region
      %s73 = ssub.s32 %s7, 1
    $region12: #{conv_caps_layer_3d.3} parent=5 // pred_fallthru
      _
    %p74 = scmp.lt.s32.totalorder %s7, 2
    // Predicated region
    $region13: #{conv_caps_layer_3d.3} parent=5 // pred_check
      %p75 = pneg %p74
    $region14: #{conv_caps_layer_3d.3} parent=5 // pred_check_branch
      %77 = sbr.rel (%p75) target = $region16
    $region15: #{conv_caps_layer_3d.3} parent=5 // pred_region
      // Predicated region
      $region17: #{conv_caps_layer_3d.3} parent=15 // pred_check
        %p78 = pneg %p27
      $region18: #{conv_caps_layer_3d.3} parent=15 // pred_check_branch
        %80 = sbr.rel (%p78) target = $region20
      $region19: #{conv_caps_layer_3d.3} parent=15 // pred_region
        %p81 = scmp.lt.s32.totalorder %s7, 1
        %s82 = scalar_select %p81, %s7, 1
        %s83 = smul.addr %s82, 16
        %s84 = smul.addr %s83, 4
        %s85 = scalar_lea.vmem %s0, %s84
      $region20: #{conv_caps_layer_3d.3} parent=15 // pred_fallthru
        _
    $region16: #{conv_caps_layer_3d.3} parent=5 // pred_fallthru
      _
    %p86 = scmp.le.s32.totalorder 1, %s7
    %p87 = scmp.lt.s32.totalorder %s7, 3
    %p88 = pnand %p86, %p87
    %p89 = pneg %p88
    // Predicated region
    $region21: #{conv_caps_layer_3d.3} parent=5 // pred_check
      _
    $region22: #{conv_caps_layer_3d.3} parent=5 // pred_check_branch
      %91 = sbr.rel (%p88) target = $region24
    $region23: #{conv_caps_layer_3d.3} parent=5 // pred_region
      %s92 = ssub.s32 %s7, 1
      %p93 = scmp.lt.s32.totalorder %s12, 1
      %s94 = scalar_select %p93, %s12, 1
      %s95 = smul.addr %s94, 16
      %s96 = smul.addr %s95, 4
      %s97 = scalar_lea.vmem %s0, %s96
      %p98 = pneg %p33
      %p99 = pneg %p30
      %p100 = pneg %p59
      %p101 = pneg %p56
      %p102 = scmp.lt.s32.totalorder %s12, 1
      %s103 = scalar_select %p102, %s12, 1
      %s104 = smul.addr %s103, 4
      %s105 = smul.addr %s104, 4
      %s106 = scalar_lea.vmem %s1, %s105
      %p107 = scmp.lt.s32.totalorder %s12, 1
      %s108 = scalar_select %p107, %s12, 1
      %s109 = smul.addr %s108, 16
      %s110 = smul.addr %s109, 4
      %s111 = scalar_lea.vmem %s0, %s110
      %p112 = scmp.lt.s32.totalorder %s12, 1
      %s113 = scalar_select %p112, %s12, 1
      %s114 = smul.addr %s113, 4
      %s115 = smul.addr %s114, 4
      %s116 = scalar_lea.vmem %s1, %s115
      %v117 = vld [vmem:[%s111] sm:$0xff]
      %v118 = vld [vmem:[%s111 + $0x8] sm:$0xff]
      %v119 = vld [vmem:[%s111 + $0x10] sm:$0xff]
      %v120 = vld [vmem:[%s111 + $0x18] sm:$0xff]
      %v121 = vld [vmem:[%s111 + $0x20] sm:$0xff]
      %v122 = vld [vmem:[%s111 + $0x28] sm:$0xff]
      %v123 = vld [vmem:[%s111 + $0x30] sm:$0xff]
      %v124 = vld [vmem:[%s111 + $0x38] sm:$0xff]
      %125 = vadd.xlane.f32.xlu0 4.0
      %v126 = vpop.xlane.xlu0 %125
      %v127 = vrcp.pop %v126
      %v128 = vmul.f32 1.0, %v127
      %v129 = vmul.f32 %v128, %v117
      %v130 = vmul.f32 %v128, %v118
      %v131 = vmul.f32 %v128, %v119
      %v132 = vmul.f32 %v128, %v120
      %v133 = vmul.f32 %v128, %v121
      %v134 = vmul.f32 %v128, %v122
      %v135 = vmul.f32 %v128, %v123
      %v136 = vmul.f32 %v128, %v124
      %v137 = vadd.f32 %v129, %v131
      %v138 = vadd.f32 %v130, %v132
      %v139 = vadd.f32 %v137, %v133
      %v140 = vadd.f32 %v138, %v134
      %v141 = vadd.f32 %v139, %v135
      %v142 = vadd.f32 %v140, %v136
      %v143 = vand.u32 2147483647, %v141
      %v144 = vand.u32 2147483647, %v142
      %v145 = vmul.f32 %v141, %v141
      %v146 = vmul.f32 %v142, %v142
      %v147 = vadd.f32 %v145, 1.0
      %v148 = vadd.f32 %v146, 1.0
      %v149 = vadd.f32 %v147, 1e-20
      %v150 = vadd.f32 %v148, 1e-20
      %v151 = vrcp.pop %v149
      %v152 = vmul.f32 %v143, %v151
      %v153 = vrcp.pop %v150
      %v154 = vmul.f32 %v144, %v153
      %v155 = vmul.f32 %v152, %v141
      %v156 = vmul.f32 %v154, %v142
      %v157 = vmul.f32 %v155, %v117
      %v158 = vmul.f32 %v156, %v118
      %v159 = vmul.f32 %v155, %v119
      %v160 = vmul.f32 %v156, %v120
      %v161 = vmul.f32 %v155, %v121
      %v162 = vmul.f32 %v156, %v122
      %v163 = vmul.f32 %v155, %v123
      %v164 = vmul.f32 %v156, %v124
      %v173 = vrot.slane %v157, 5
      %v174 = vrot.slane %v173, 4
      %v175 = vrot.slane %v158, 5
      %v176 = vrot.slane %v175, 4
      %v177 = vrot.slane %v159, 5
      %v178 = vrot.slane %v177, 4
      %v179 = vrot.slane %v160, 5
      %v180 = vrot.slane %v179, 4
      %v181 = vrot.slane %v161, 5
      %v182 = vrot.slane %v181, 4
      %v183 = vrot.slane %v162, 5
      %v184 = vrot.slane %v183, 4
      %v185 = vrot.slane %v163, 5
      %v186 = vrot.slane %v185, 4
      %v187 = vrot.slane %v164, 5
      %v188 = vrot.slane %v187, 4
      %v197 = vadd.f32 %v157, %v174
      %v198 = vadd.f32 %v158, %v176
      %v199 = vadd.f32 %v159, %v178
      %v200 = vadd.f32 %v160, %v180
      %v201 = vadd.f32 %v161, %v182
      %v202 = vadd.f32 %v162, %v184
      %v203 = vadd.f32 %v163, %v186
      %v204 = vadd.f32 %v164, %v188
      %v205 = vrot.slane %v157, 6
      %v206 = vrot.slane %v205, 4
      %v207 = vrot.slane %v158, 6
      %v208 = vrot.slane %v207, 4
      %v209 = vrot.slane %v159, 6
      %v210 = vrot.slane %v209, 4
      %v211 = vrot.slane %v160, 6
      %v212 = vrot.slane %v211, 4
      %v213 = vrot.slane %v161, 6
      %v214 = vrot.slane %v213, 4
      %v215 = vrot.slane %v162, 6
      %v216 = vrot.slane %v215, 4
      %v217 = vrot.slane %v163, 6
      %v218 = vrot.slane %v217, 4
      %v219 = vrot.slane %v164, 6
      %v220 = vrot.slane %v219, 4
      %v229 = vadd.f32 %v197, %v206
      %v230 = vadd.f32 %v198, %v208
      %v231 = vadd.f32 %v199, %v210
      %v232 = vadd.f32 %v200, %v212
      %v233 = vadd.f32 %v201, %v214
      %v234 = vadd.f32 %v202, %v216
      %v235 = vadd.f32 %v203, %v218
      %v236 = vadd.f32 %v204, %v220
      %v237 = vrot.slane %v157, 7
      %v238 = vrot.slane %v237, 4
      %v239 = vrot.slane %v158, 7
      %v240 = vrot.slane %v239, 4
      %v241 = vrot.slane %v159, 7
      %v242 = vrot.slane %v241, 4
      %v243 = vrot.slane %v160, 7
      %v244 = vrot.slane %v243, 4
      %v245 = vrot.slane %v161, 7
      %v246 = vrot.slane %v245, 4
      %v247 = vrot.slane %v162, 7
      %v248 = vrot.slane %v247, 4
      %v249 = vrot.slane %v163, 7
      %v250 = vrot.slane %v249, 4
      %v251 = vrot.slane %v164, 7
      %v252 = vrot.slane %v251, 4
      %v261 = vadd.f32 %v229, %v238
      %v262 = vadd.f32 %v230, %v240
      %v263 = vadd.f32 %v231, %v242
      %v264 = vadd.f32 %v232, %v244
      %v265 = vadd.f32 %v233, %v246
      %v266 = vadd.f32 %v234, %v248
      %v267 = vadd.f32 %v235, %v250
      %v268 = vadd.f32 %v236, %v252
      %v269 = vadd.f32 %v261, 0.0
      %v270 = vadd.f32 %v262, 0.0
      %v271 = vadd.f32 %v263, 0.0
      %v272 = vadd.f32 %v264, 0.0
      %v273 = vadd.f32 %v265, 0.0
      %v274 = vadd.f32 %v266, 0.0
      %v275 = vadd.f32 %v267, 0.0
      %v276 = vadd.f32 %v268, 0.0
      %v285 = vlaneseq
      %v286 = vshrl.u32 %v285, 7
      %v287 = vsub.s32 0, %v286
      %v288 = vrot.slane %v269, %v287
      %v289 = vlaneseq
      %v290 = vshrl.u32 %v289, 7
      %v291 = vsub.s32 4, %v290
      %v292 = vrot.slane %v269, %v291
      %v293 = vlaneseq
      %v294 = vshrl.u32 %v293, 7
      %v295 = vsub.s32 0, %v294
      %v296 = vrot.slane %v270, %v295
      %v297 = vlaneseq
      %v298 = vshrl.u32 %v297, 7
      %v299 = vsub.s32 4, %v298
      %v300 = vrot.slane %v270, %v299
      %v301 = vlaneseq
      %v302 = vshrl.u32 %v301, 7
      %v303 = vsub.s32 0, %v302
      %v304 = vrot.slane %v271, %v303
      %v305 = vlaneseq
      %v306 = vshrl.u32 %v305, 7
      %v307 = vsub.s32 4, %v306
      %v308 = vrot.slane %v271, %v307
      %v309 = vlaneseq
      %v310 = vshrl.u32 %v309, 7
      %v311 = vsub.s32 0, %v310
      %v312 = vrot.slane %v272, %v311
      %v313 = vlaneseq
      %v314 = vshrl.u32 %v313, 7
      %v315 = vsub.s32 4, %v314
      %v316 = vrot.slane %v272, %v315
      %v317 = vlaneseq
      %v318 = vshrl.u32 %v317, 7
      %v319 = vsub.s32 0, %v318
      %v320 = vrot.slane %v273, %v319
      %v321 = vlaneseq
      %v322 = vshrl.u32 %v321, 7
      %v323 = vsub.s32 4, %v322
      %v324 = vrot.slane %v273, %v323
      %v325 = vlaneseq
      %v326 = vshrl.u32 %v325, 7
      %v327 = vsub.s32 0, %v326
      %v328 = vrot.slane %v274, %v327
      %v329 = vlaneseq
      %v330 = vshrl.u32 %v329, 7
      %v331 = vsub.s32 4, %v330
      %v332 = vrot.slane %v274, %v331
      %v333 = vlaneseq
      %v334 = vshrl.u32 %v333, 7
      %v335 = vsub.s32 0, %v334
      %v336 = vrot.slane %v275, %v335
      %v337 = vlaneseq
      %v338 = vshrl.u32 %v337, 7
      %v339 = vsub.s32 4, %v338
      %v340 = vrot.slane %v275, %v339
      %v341 = vlaneseq
      %v342 = vshrl.u32 %v341, 7
      %v343 = vsub.s32 0, %v342
      %v344 = vrot.slane %v276, %v343
      %v345 = vlaneseq
      %v346 = vshrl.u32 %v345, 7
      %v347 = vsub.s32 4, %v346
      %v348 = vrot.slane %v276, %v347
      %vm365 = vcmask 1040384
      %v366 = vsel %vm365, %v288, -inf
      %v367 = vsel %vm365, %v292, -inf
      %v368 = vmax.f32 %v366, %v367
      %v369 = vsel %vm365, %v296, -inf
      %v370 = vmax.f32 %v368, %v369
      %v371 = vsel %vm365, %v300, -inf
      %v372 = vmax.f32 %v370, %v371
      %373 = vmax.xlane.f32.xlu0 %v372
      %v374 = vpop.xlane.xlu0 %373
      %v375 = vsel %vm365, %v304, -inf
      %v376 = vsel %vm365, %v308, -inf
      %v377 = vmax.f32 %v375, %v376
      %v378 = vsel %vm365, %v312, -inf
      %v379 = vmax.f32 %v377, %v378
      %v380 = vsel %vm365, %v316, -inf
      %v381 = vmax.f32 %v379, %v380
      %382 = vmax.xlane.f32.xlu0 %v381
      %v383 = vpop.xlane.xlu0 %382
      %v384 = vsel %vm365, %v320, -inf
      %v385 = vsel %vm365, %v324, -inf
      %v386 = vmax.f32 %v384, %v385
      %v387 = vsel %vm365, %v328, -inf
      %v388 = vmax.f32 %v386, %v387
      %v389 = vsel %vm365, %v332, -inf
      %v390 = vmax.f32 %v388, %v389
      %391 = vmax.xlane.f32.xlu0 %v390
      %v392 = vpop.xlane.xlu0 %391
      %v393 = vsel %vm365, %v336, -inf
      %v394 = vsel %vm365, %v340, -inf
      %v395 = vmax.f32 %v393, %v394
      %v396 = vsel %vm365, %v344, -inf
      %v397 = vmax.f32 %v395, %v396
      %v398 = vsel %vm365, %v348, -inf
      %v399 = vmax.f32 %v397, %v398
      %400 = vmax.xlane.f32.xlu0 %v399
      %v401 = vpop.xlane.xlu0 %400
      %v407 = vunpack.c.l.s4 839922192
      %v408 = vunpack.c.0.s8 %v407
      %v409 = vlaneseq
      %v410 = vshrl.u32 %v409, 7
      %v411 = vsub.s32 %v408, %v410
      %v412 = vrot.slane %v374, %v411
      %v414 = vunpack.c.l.s4 839922192
      %v415 = vunpack.c.0.s8 %v414
      %v416 = vlaneseq
      %v417 = vshrl.u32 %v416, 7
      %v418 = vsub.s32 %v415, %v417
      %v419 = vrot.slane %v383, %v418
      %v421 = vunpack.c.l.s4 839922192
      %v422 = vunpack.c.0.s8 %v421
      %v423 = vlaneseq
      %v424 = vshrl.u32 %v423, 7
      %v425 = vsub.s32 %v422, %v424
      %v426 = vrot.slane %v392, %v425
      %v428 = vunpack.c.l.s4 839922192
      %v429 = vunpack.c.0.s8 %v428
      %v430 = vlaneseq
      %v431 = vshrl.u32 %v430, 7
      %v432 = vsub.s32 %v429, %v431
      %v433 = vrot.slane %v401, %v432
      %v438 = vsub.f32 %v269, %v412
      %v439 = vsub.f32 %v270, %v412
      %v440 = vsub.f32 %v271, %v419
      %v441 = vsub.f32 %v272, %v419
      %v442 = vsub.f32 %v273, %v426
      %v443 = vsub.f32 %v274, %v426
      %v444 = vsub.f32 %v275, %v433
      %v445 = vsub.f32 %v276, %v433
      %v446 = vmul.f32 %v438, 1.442695
      %v447 = vpow.pop %v446
      %v448 = vmul.f32 %v439, 1.442695
      %v449 = vpow.pop %v448
      %v450 = vmul.f32 %v440, 1.442695
      %v451 = vpow.pop %v450
      %v452 = vmul.f32 %v441, 1.442695
      %v453 = vpow.pop %v452
      %v454 = vmul.f32 %v442, 1.442695
      %v455 = vpow.pop %v454
      %v456 = vmul.f32 %v443, 1.442695
      %v457 = vpow.pop %v456
      %v458 = vmul.f32 %v444, 1.442695
      %v459 = vpow.pop %v458
      %v460 = vmul.f32 %v445, 1.442695
      %v461 = vpow.pop %v460
      %v470 = vlaneseq
      %v471 = vshrl.u32 %v470, 7
      %v472 = vsub.s32 0, %v471
      %v473 = vrot.slane %v447, %v472
      %v474 = vlaneseq
      %v475 = vshrl.u32 %v474, 7
      %v476 = vsub.s32 4, %v475
      %v477 = vrot.slane %v447, %v476
      %v478 = vlaneseq
      %v479 = vshrl.u32 %v478, 7
      %v480 = vsub.s32 0, %v479
      %v481 = vrot.slane %v449, %v480
      %v482 = vlaneseq
      %v483 = vshrl.u32 %v482, 7
      %v484 = vsub.s32 4, %v483
      %v485 = vrot.slane %v449, %v484
      %v486 = vlaneseq
      %v487 = vshrl.u32 %v486, 7
      %v488 = vsub.s32 0, %v487
      %v489 = vrot.slane %v451, %v488
      %v490 = vlaneseq
      %v491 = vshrl.u32 %v490, 7
      %v492 = vsub.s32 4, %v491
      %v493 = vrot.slane %v451, %v492
      %v494 = vlaneseq
      %v495 = vshrl.u32 %v494, 7
      %v496 = vsub.s32 0, %v495
      %v497 = vrot.slane %v453, %v496
      %v498 = vlaneseq
      %v499 = vshrl.u32 %v498, 7
      %v500 = vsub.s32 4, %v499
      %v501 = vrot.slane %v453, %v500
      %v502 = vlaneseq
      %v503 = vshrl.u32 %v502, 7
      %v504 = vsub.s32 0, %v503
      %v505 = vrot.slane %v455, %v504
      %v506 = vlaneseq
      %v507 = vshrl.u32 %v506, 7
      %v508 = vsub.s32 4, %v507
      %v509 = vrot.slane %v455, %v508
      %v510 = vlaneseq
      %v511 = vshrl.u32 %v510, 7
      %v512 = vsub.s32 0, %v511
      %v513 = vrot.slane %v457, %v512
      %v514 = vlaneseq
      %v515 = vshrl.u32 %v514, 7
      %v516 = vsub.s32 4, %v515
      %v517 = vrot.slane %v457, %v516
      %v518 = vlaneseq
      %v519 = vshrl.u32 %v518, 7
      %v520 = vsub.s32 0, %v519
      %v521 = vrot.slane %v459, %v520
      %v522 = vlaneseq
      %v523 = vshrl.u32 %v522, 7
      %v524 = vsub.s32 4, %v523
      %v525 = vrot.slane %v459, %v524
      %v526 = vlaneseq
      %v527 = vshrl.u32 %v526, 7
      %v528 = vsub.s32 0, %v527
      %v529 = vrot.slane %v461, %v528
      %v530 = vlaneseq
      %v531 = vshrl.u32 %v530, 7
      %v532 = vsub.s32 4, %v531
      %v533 = vrot.slane %v461, %v532
      %v550 = vsel %vm365, %v473, 0.0
      %v551 = vsel %vm365, %v477, 0.0
      %v552 = vadd.f32 %v550, %v551
      %v553 = vsel %vm365, %v481, 0.0
      %v554 = vadd.f32 %v552, %v553
      %v555 = vsel %vm365, %v485, 0.0
      %v556 = vadd.f32 %v554, %v555
      %557 = vadd.xlane.f32.xlu0 %v556
      %v558 = vpop.xlane.xlu0 %557
      %v559 = vsel %vm365, %v489, 0.0
      %v560 = vsel %vm365, %v493, 0.0
      %v561 = vadd.f32 %v559, %v560
      %v562 = vsel %vm365, %v497, 0.0
      %v563 = vadd.f32 %v561, %v562
      %v564 = vsel %vm365, %v501, 0.0
      %v565 = vadd.f32 %v563, %v564
      %566 = vadd.xlane.f32.xlu0 %v565
      %v567 = vpop.xlane.xlu0 %566
      %v568 = vsel %vm365, %v505, 0.0
      %v569 = vsel %vm365, %v509, 0.0
      %v570 = vadd.f32 %v568, %v569
      %v571 = vsel %vm365, %v513, 0.0
      %v572 = vadd.f32 %v570, %v571
      %v573 = vsel %vm365, %v517, 0.0
      %v574 = vadd.f32 %v572, %v573
      %575 = vadd.xlane.f32.xlu0 %v574
      %v576 = vpop.xlane.xlu0 %575
      %v577 = vsel %vm365, %v521, 0.0
      %v578 = vsel %vm365, %v525, 0.0
      %v579 = vadd.f32 %v577, %v578
      %v580 = vsel %vm365, %v529, 0.0
      %v581 = vadd.f32 %v579, %v580
      %v582 = vsel %vm365, %v533, 0.0
      %v583 = vadd.f32 %v581, %v582
      %584 = vadd.xlane.f32.xlu0 %v583
      %v585 = vpop.xlane.xlu0 %584
      %v591 = vunpack.c.l.s4 839922192
      %v592 = vunpack.c.0.s8 %v591
      %v593 = vlaneseq
      %v594 = vshrl.u32 %v593, 7
      %v595 = vsub.s32 %v592, %v594
      %v596 = vrot.slane %v558, %v595
      %v598 = vunpack.c.l.s4 839922192
      %v599 = vunpack.c.0.s8 %v598
      %v600 = vlaneseq
      %v601 = vshrl.u32 %v600, 7
      %v602 = vsub.s32 %v599, %v601
      %v603 = vrot.slane %v567, %v602
      %v605 = vunpack.c.l.s4 839922192
      %v606 = vunpack.c.0.s8 %v605
      %v607 = vlaneseq
      %v608 = vshrl.u32 %v607, 7
      %v609 = vsub.s32 %v606, %v608
      %v610 = vrot.slane %v576, %v609
      %v612 = vunpack.c.l.s4 839922192
      %v613 = vunpack.c.0.s8 %v612
      %v614 = vlaneseq
      %v615 = vshrl.u32 %v614, 7
      %v616 = vsub.s32 %v613, %v615
      %v617 = vrot.slane %v585, %v616
      %v622 = vrcp.pop %v596
      %v623 = vmul.f32 %v447, %v622
      %v624 = vmul.f32 %v449, %v622
      %v625 = vrcp.pop %v603
      %v626 = vmul.f32 %v451, %v625
      %v627 = vmul.f32 %v453, %v625
      %v628 = vrcp.pop %v610
      %v629 = vmul.f32 %v455, %v628
      %v630 = vmul.f32 %v457, %v628
      %v631 = vrcp.pop %v617
      %v632 = vmul.f32 %v459, %v631
      %v633 = vmul.f32 %v461, %v631
      %v642 = vlaneseq
      %v643 = vshrl.u32 %v642, 7
      %v644 = vsub.s32 0, %v643
      %v645 = vrot.slane %v623, %v644
      %v646 = vlaneseq
      %v647 = vshrl.u32 %v646, 7
      %v648 = vsub.s32 4, %v647
      %v649 = vrot.slane %v623, %v648
      %v650 = vlaneseq
      %v651 = vshrl.u32 %v650, 7
      %v652 = vsub.s32 0, %v651
      %v653 = vrot.slane %v624, %v652
      %v654 = vlaneseq
      %v655 = vshrl.u32 %v654, 7
      %v656 = vsub.s32 4, %v655
      %v657 = vrot.slane %v624, %v656
      %v658 = vlaneseq
      %v659 = vshrl.u32 %v658, 7
      %v660 = vsub.s32 0, %v659
      %v661 = vrot.slane %v626, %v660
      %v662 = vlaneseq
      %v663 = vshrl.u32 %v662, 7
      %v664 = vsub.s32 4, %v663
      %v665 = vrot.slane %v626, %v664
      %v666 = vlaneseq
      %v667 = vshrl.u32 %v666, 7
      %v668 = vsub.s32 0, %v667
      %v669 = vrot.slane %v627, %v668
      %v670 = vlaneseq
      %v671 = vshrl.u32 %v670, 7
      %v672 = vsub.s32 4, %v671
      %v673 = vrot.slane %v627, %v672
      %v674 = vlaneseq
      %v675 = vshrl.u32 %v674, 7
      %v676 = vsub.s32 0, %v675
      %v677 = vrot.slane %v629, %v676
      %v678 = vlaneseq
      %v679 = vshrl.u32 %v678, 7
      %v680 = vsub.s32 4, %v679
      %v681 = vrot.slane %v629, %v680
      %v682 = vlaneseq
      %v683 = vshrl.u32 %v682, 7
      %v684 = vsub.s32 0, %v683
      %v685 = vrot.slane %v630, %v684
      %v686 = vlaneseq
      %v687 = vshrl.u32 %v686, 7
      %v688 = vsub.s32 4, %v687
      %v689 = vrot.slane %v630, %v688
      %v690 = vlaneseq
      %v691 = vshrl.u32 %v690, 7
      %v692 = vsub.s32 0, %v691
      %v693 = vrot.slane %v632, %v692
      %v694 = vlaneseq
      %v695 = vshrl.u32 %v694, 7
      %v696 = vsub.s32 4, %v695
      %v697 = vrot.slane %v632, %v696
      %v698 = vlaneseq
      %v699 = vshrl.u32 %v698, 7
      %v700 = vsub.s32 0, %v699
      %v701 = vrot.slane %v633, %v700
      %v702 = vlaneseq
      %v703 = vshrl.u32 %v702, 7
      %v704 = vsub.s32 4, %v703
      %v705 = vrot.slane %v633, %v704
      %v722 = vlaneseq
      %v723 = vshrl.u32 %v722, 7
      %v724 = vsub.s32 0, %v723
      %v725 = vrot.slane %v645, %v724
      %v726 = vlaneseq
      %v727 = vshrl.u32 %v726, 7
      %v728 = vsub.s32 0, %v727
      %v729 = vrot.slane %v649, %v728
      %v730 = vlaneseq
      %v731 = vshrl.u32 %v730, 7
      %v732 = vsub.s32 0, %v731
      %v733 = vrot.slane %v653, %v732
      %v734 = vlaneseq
      %v735 = vshrl.u32 %v734, 7
      %v736 = vsub.s32 0, %v735
      %v737 = vrot.slane %v657, %v736
      %v738 = vlaneseq
      %v739 = vshrl.u32 %v738, 7
      %v740 = vsub.s32 0, %v739
      %v741 = vrot.slane %v661, %v740
      %v742 = vlaneseq
      %v743 = vshrl.u32 %v742, 7
      %v744 = vsub.s32 0, %v743
      %v745 = vrot.slane %v665, %v744
      %v746 = vlaneseq
      %v747 = vshrl.u32 %v746, 7
      %v748 = vsub.s32 0, %v747
      %v749 = vrot.slane %v669, %v748
      %v750 = vlaneseq
      %v751 = vshrl.u32 %v750, 7
      %v752 = vsub.s32 0, %v751
      %v753 = vrot.slane %v673, %v752
      %v754 = vlaneseq
      %v755 = vshrl.u32 %v754, 7
      %v756 = vsub.s32 0, %v755
      %v757 = vrot.slane %v677, %v756
      %v758 = vlaneseq
      %v759 = vshrl.u32 %v758, 7
      %v760 = vsub.s32 0, %v759
      %v761 = vrot.slane %v681, %v760
      %v762 = vlaneseq
      %v763 = vshrl.u32 %v762, 7
      %v764 = vsub.s32 0, %v763
      %v765 = vrot.slane %v685, %v764
      %v766 = vlaneseq
      %v767 = vshrl.u32 %v766, 7
      %v768 = vsub.s32 0, %v767
      %v769 = vrot.slane %v689, %v768
      %v770 = vlaneseq
      %v771 = vshrl.u32 %v770, 7
      %v772 = vsub.s32 0, %v771
      %v773 = vrot.slane %v693, %v772
      %v774 = vlaneseq
      %v775 = vshrl.u32 %v774, 7
      %v776 = vsub.s32 0, %v775
      %v777 = vrot.slane %v697, %v776
      %v778 = vlaneseq
      %v779 = vshrl.u32 %v778, 7
      %v780 = vsub.s32 0, %v779
      %v781 = vrot.slane %v701, %v780
      %v782 = vlaneseq
      %v783 = vshrl.u32 %v782, 7
      %v784 = vsub.s32 0, %v783
      %v785 = vrot.slane %v705, %v784
      %v794 = vcombine.high %v117, %v117
      %v795 = vcombine.high %v118, %v118
      %v796 = vcombine.high %v119, %v119
      %v797 = vcombine.high %v120, %v120
      %v798 = vcombine.high %v121, %v121
      %v799 = vcombine.high %v122, %v122
      %v800 = vcombine.high %v123, %v123
      %v801 = vcombine.high %v124, %v124
      %v810 = vmul.f32 %v725, %v117
      %v811 = vmul.f32 %v729, %v794
      %v812 = vmul.f32 %v733, %v118
      %v813 = vmul.f32 %v737, %v795
      %v814 = vmul.f32 %v741, %v119
      %v815 = vmul.f32 %v745, %v796
      %v816 = vmul.f32 %v749, %v120
      %v817 = vmul.f32 %v753, %v797
      %v818 = vmul.f32 %v757, %v121
      %v819 = vmul.f32 %v761, %v798
      %v820 = vmul.f32 %v765, %v122
      %v821 = vmul.f32 %v769, %v799
      %v822 = vmul.f32 %v773, %v123
      %v823 = vmul.f32 %v777, %v800
      %v824 = vmul.f32 %v781, %v124
      %v825 = vmul.f32 %v785, %v801
      %v826 = vadd.f32 %v810, %v814
      %v827 = vadd.f32 %v811, %v815
      %v828 = vadd.f32 %v812, %v816
      %v829 = vadd.f32 %v813, %v817
      %v830 = vadd.f32 %v826, %v818
      %v831 = vadd.f32 %v827, %v819
      %v832 = vadd.f32 %v828, %v820
      %v833 = vadd.f32 %v829, %v821
      %v834 = vadd.f32 %v830, %v822
      %v835 = vadd.f32 %v831, %v823
      %v836 = vadd.f32 %v832, %v824
      %v837 = vadd.f32 %v833, %v825
      %v838 = vand.u32 2147483647, %v834
      %v839 = vand.u32 2147483647, %v835
      %v840 = vand.u32 2147483647, %v836
      %v841 = vand.u32 2147483647, %v837
      %v842 = vmul.f32 %v834, %v834
      %v843 = vmul.f32 %v835, %v835
      %v844 = vmul.f32 %v836, %v836
      %v845 = vmul.f32 %v837, %v837
      %v846 = vadd.f32 %v842, 1.0
      %v847 = vadd.f32 %v843, 1.0
      %v848 = vadd.f32 %v844, 1.0
      %v849 = vadd.f32 %v845, 1.0
      %v850 = vadd.f32 %v846, 1e-20
      %v851 = vadd.f32 %v847, 1e-20
      %v852 = vadd.f32 %v848, 1e-20
      %v853 = vadd.f32 %v849, 1e-20
      %v854 = vrcp.pop %v850
      %v855 = vmul.f32 %v838, %v854
      %v856 = vrcp.pop %v851
      %v857 = vmul.f32 %v839, %v856
      %v858 = vrcp.pop %v852
      %v859 = vmul.f32 %v840, %v858
      %v860 = vrcp.pop %v853
      %v861 = vmul.f32 %v841, %v860
      %v862 = vmul.f32 %v855, %v834
      %v863 = vmul.f32 %v857, %v835
      %v864 = vmul.f32 %v859, %v836
      %v865 = vmul.f32 %v861, %v837
      %v866 = vmul.f32 %v862, %v117
      %v867 = vmul.f32 %v863, %v794
      %v868 = vmul.f32 %v864, %v118
      %v869 = vmul.f32 %v865, %v795
      %v870 = vmul.f32 %v862, %v119
      %v871 = vmul.f32 %v863, %v796
      %v872 = vmul.f32 %v864, %v120
      %v873 = vmul.f32 %v865, %v797
      %v874 = vmul.f32 %v862, %v121
      %v875 = vmul.f32 %v863, %v798
      %v876 = vmul.f32 %v864, %v122
      %v877 = vmul.f32 %v865, %v799
      %v878 = vmul.f32 %v862, %v123
      %v879 = vmul.f32 %v863, %v800
      %v880 = vmul.f32 %v864, %v124
      %v881 = vmul.f32 %v865, %v801
      %v898 = vrot.slane %v866, 1
      %v899 = vrot.slane %v867, 1
      %v900 = vrot.slane %v868, 1
      %v901 = vrot.slane %v869, 1
      %v902 = vrot.slane %v870, 1
      %v903 = vrot.slane %v871, 1
      %v904 = vrot.slane %v872, 1
      %v905 = vrot.slane %v873, 1
      %v906 = vrot.slane %v874, 1
      %v907 = vrot.slane %v875, 1
      %v908 = vrot.slane %v876, 1
      %v909 = vrot.slane %v877, 1
      %v910 = vrot.slane %v878, 1
      %v911 = vrot.slane %v879, 1
      %v912 = vrot.slane %v880, 1
      %v913 = vrot.slane %v881, 1
      %v930 = vadd.f32 %v866, %v898
      %v931 = vadd.f32 %v867, %v899
      %v932 = vadd.f32 %v868, %v900
      %v933 = vadd.f32 %v869, %v901
      %v934 = vadd.f32 %v870, %v902
      %v935 = vadd.f32 %v871, %v903
      %v936 = vadd.f32 %v872, %v904
      %v937 = vadd.f32 %v873, %v905
      %v938 = vadd.f32 %v874, %v906
      %v939 = vadd.f32 %v875, %v907
      %v940 = vadd.f32 %v876, %v908
      %v941 = vadd.f32 %v877, %v909
      %v942 = vadd.f32 %v878, %v910
      %v943 = vadd.f32 %v879, %v911
      %v944 = vadd.f32 %v880, %v912
      %v945 = vadd.f32 %v881, %v913
      %v946 = vrot.slane %v866, 2
      %v947 = vrot.slane %v867, 2
      %v948 = vrot.slane %v868, 2
      %v949 = vrot.slane %v869, 2
      %v950 = vrot.slane %v870, 2
      %v951 = vrot.slane %v871, 2
      %v952 = vrot.slane %v872, 2
      %v953 = vrot.slane %v873, 2
      %v954 = vrot.slane %v874, 2
      %v955 = vrot.slane %v875, 2
      %v956 = vrot.slane %v876, 2
      %v957 = vrot.slane %v877, 2
      %v958 = vrot.slane %v878, 2
      %v959 = vrot.slane %v879, 2
      %v960 = vrot.slane %v880, 2
      %v961 = vrot.slane %v881, 2
      %v978 = vadd.f32 %v930, %v946
      %v979 = vadd.f32 %v931, %v947
      %v980 = vadd.f32 %v932, %v948
      %v981 = vadd.f32 %v933, %v949
      %v982 = vadd.f32 %v934, %v950
      %v983 = vadd.f32 %v935, %v951
      %v984 = vadd.f32 %v936, %v952
      %v985 = vadd.f32 %v937, %v953
      %v986 = vadd.f32 %v938, %v954
      %v987 = vadd.f32 %v939, %v955
      %v988 = vadd.f32 %v940, %v956
      %v989 = vadd.f32 %v941, %v957
      %v990 = vadd.f32 %v942, %v958
      %v991 = vadd.f32 %v943, %v959
      %v992 = vadd.f32 %v944, %v960
      %v993 = vadd.f32 %v945, %v961
      %v994 = vrot.slane %v866, 3
      %v995 = vrot.slane %v867, 3
      %v996 = vrot.slane %v868, 3
      %v997 = vrot.slane %v869, 3
      %v998 = vrot.slane %v870, 3
      %v999 = vrot.slane %v871, 3
      %v1000 = vrot.slane %v872, 3
      %v1001 = vrot.slane %v873, 3
      %v1002 = vrot.slane %v874, 3
      %v1003 = vrot.slane %v875, 3
      %v1004 = vrot.slane %v876, 3
      %v1005 = vrot.slane %v877, 3
      %v1006 = vrot.slane %v878, 3
      %v1007 = vrot.slane %v879, 3
      %v1008 = vrot.slane %v880, 3
      %v1009 = vrot.slane %v881, 3
      %v1026 = vadd.f32 %v978, %v994
      %v1027 = vadd.f32 %v979, %v995
      %v1028 = vadd.f32 %v980, %v996
      %v1029 = vadd.f32 %v981, %v997
      %v1030 = vadd.f32 %v982, %v998
      %v1031 = vadd.f32 %v983, %v999
      %v1032 = vadd.f32 %v984, %v1000
      %v1033 = vadd.f32 %v985, %v1001
      %v1034 = vadd.f32 %v986, %v1002
      %v1035 = vadd.f32 %v987, %v1003
      %v1036 = vadd.f32 %v988, %v1004
      %v1037 = vadd.f32 %v989, %v1005
      %v1038 = vadd.f32 %v990, %v1006
      %v1039 = vadd.f32 %v991, %v1007
      %v1040 = vadd.f32 %v992, %v1008
      %v1041 = vadd.f32 %v993, %v1009
      %v1058 = vcombine.low %v1026, %v1027
      %v1059 = vcombine.low %v1028, %v1029
      %v1060 = vcombine.low %v1030, %v1031
      %v1061 = vcombine.low %v1032, %v1033
      %v1062 = vcombine.low %v1034, %v1035
      %v1063 = vcombine.low %v1036, %v1037
      %v1064 = vcombine.low %v1038, %v1039
      %v1065 = vcombine.low %v1040, %v1041
      %v1074 = vadd.f32 %v269, %v1058
      %v1075 = vadd.f32 %v270, %v1059
      %v1076 = vadd.f32 %v271, %v1060
      %v1077 = vadd.f32 %v272, %v1061
      %v1078 = vadd.f32 %v273, %v1062
      %v1079 = vadd.f32 %v274, %v1063
      %v1080 = vadd.f32 %v275, %v1064
      %v1081 = vadd.f32 %v276, %v1065
      %v1090 = vlaneseq
      %v1091 = vshrl.u32 %v1090, 7
      %v1092 = vsub.s32 0, %v1091
      %v1093 = vrot.slane %v1074, %v1092
      %v1094 = vlaneseq
      %v1095 = vshrl.u32 %v1094, 7
      %v1096 = vsub.s32 4, %v1095
      %v1097 = vrot.slane %v1074, %v1096
      %v1098 = vlaneseq
      %v1099 = vshrl.u32 %v1098, 7
      %v1100 = vsub.s32 0, %v1099
      %v1101 = vrot.slane %v1075, %v1100
      %v1102 = vlaneseq
      %v1103 = vshrl.u32 %v1102, 7
      %v1104 = vsub.s32 4, %v1103
      %v1105 = vrot.slane %v1075, %v1104
      %v1106 = vlaneseq
      %v1107 = vshrl.u32 %v1106, 7
      %v1108 = vsub.s32 0, %v1107
      %v1109 = vrot.slane %v1076, %v1108
      %v1110 = vlaneseq
      %v1111 = vshrl.u32 %v1110, 7
      %v1112 = vsub.s32 4, %v1111
      %v1113 = vrot.slane %v1076, %v1112
      %v1114 = vlaneseq
      %v1115 = vshrl.u32 %v1114, 7
      %v1116 = vsub.s32 0, %v1115
      %v1117 = vrot.slane %v1077, %v1116
      %v1118 = vlaneseq
      %v1119 = vshrl.u32 %v1118, 7
      %v1120 = vsub.s32 4, %v1119
      %v1121 = vrot.slane %v1077, %v1120
      %v1122 = vlaneseq
      %v1123 = vshrl.u32 %v1122, 7
      %v1124 = vsub.s32 0, %v1123
      %v1125 = vrot.slane %v1078, %v1124
      %v1126 = vlaneseq
      %v1127 = vshrl.u32 %v1126, 7
      %v1128 = vsub.s32 4, %v1127
      %v1129 = vrot.slane %v1078, %v1128
      %v1130 = vlaneseq
      %v1131 = vshrl.u32 %v1130, 7
      %v1132 = vsub.s32 0, %v1131
      %v1133 = vrot.slane %v1079, %v1132
      %v1134 = vlaneseq
      %v1135 = vshrl.u32 %v1134, 7
      %v1136 = vsub.s32 4, %v1135
      %v1137 = vrot.slane %v1079, %v1136
      %v1138 = vlaneseq
      %v1139 = vshrl.u32 %v1138, 7
      %v1140 = vsub.s32 0, %v1139
      %v1141 = vrot.slane %v1080, %v1140
      %v1142 = vlaneseq
      %v1143 = vshrl.u32 %v1142, 7
      %v1144 = vsub.s32 4, %v1143
      %v1145 = vrot.slane %v1080, %v1144
      %v1146 = vlaneseq
      %v1147 = vshrl.u32 %v1146, 7
      %v1148 = vsub.s32 0, %v1147
      %v1149 = vrot.slane %v1081, %v1148
      %v1150 = vlaneseq
      %v1151 = vshrl.u32 %v1150, 7
      %v1152 = vsub.s32 4, %v1151
      %v1153 = vrot.slane %v1081, %v1152
      %v1170 = vsel %vm365, %v1093, -inf
      %v1171 = vsel %vm365, %v1097, -inf
      %v1172 = vmax.f32 %v1170, %v1171
      %v1173 = vsel %vm365, %v1101, -inf
      %v1174 = vmax.f32 %v1172, %v1173
      %v1175 = vsel %vm365, %v1105, -inf
      %v1176 = vmax.f32 %v1174, %v1175
      %1177 = vmax.xlane.f32.xlu0 %v1176
      %v1178 = vpop.xlane.xlu0 %1177
      %v1179 = vsel %vm365, %v1109, -inf
      %v1180 = vsel %vm365, %v1113, -inf
      %v1181 = vmax.f32 %v1179, %v1180
      %v1182 = vsel %vm365, %v1117, -inf
      %v1183 = vmax.f32 %v1181, %v1182
      %v1184 = vsel %vm365, %v1121, -inf
      %v1185 = vmax.f32 %v1183, %v1184
      %1186 = vmax.xlane.f32.xlu0 %v1185
      %v1187 = vpop.xlane.xlu0 %1186
      %v1188 = vsel %vm365, %v1125, -inf
      %v1189 = vsel %vm365, %v1129, -inf
      %v1190 = vmax.f32 %v1188, %v1189
      %v1191 = vsel %vm365, %v1133, -inf
      %v1192 = vmax.f32 %v1190, %v1191
      %v1193 = vsel %vm365, %v1137, -inf
      %v1194 = vmax.f32 %v1192, %v1193
      %1195 = vmax.xlane.f32.xlu0 %v1194
      %v1196 = vpop.xlane.xlu0 %1195
      %v1197 = vsel %vm365, %v1141, -inf
      %v1198 = vsel %vm365, %v1145, -inf
      %v1199 = vmax.f32 %v1197, %v1198
      %v1200 = vsel %vm365, %v1149, -inf
      %v1201 = vmax.f32 %v1199, %v1200
      %v1202 = vsel %vm365, %v1153, -inf
      %v1203 = vmax.f32 %v1201, %v1202
      %1204 = vmax.xlane.f32.xlu0 %v1203
      %v1205 = vpop.xlane.xlu0 %1204
      %v1211 = vunpack.c.l.s4 839922192
      %v1212 = vunpack.c.0.s8 %v1211
      %v1213 = vlaneseq
      %v1214 = vshrl.u32 %v1213, 7
      %v1215 = vsub.s32 %v1212, %v1214
      %v1216 = vrot.slane %v1178, %v1215
      %v1218 = vunpack.c.l.s4 839922192
      %v1219 = vunpack.c.0.s8 %v1218
      %v1220 = vlaneseq
      %v1221 = vshrl.u32 %v1220, 7
      %v1222 = vsub.s32 %v1219, %v1221
      %v1223 = vrot.slane %v1187, %v1222
      %v1225 = vunpack.c.l.s4 839922192
      %v1226 = vunpack.c.0.s8 %v1225
      %v1227 = vlaneseq
      %v1228 = vshrl.u32 %v1227, 7
      %v1229 = vsub.s32 %v1226, %v1228
      %v1230 = vrot.slane %v1196, %v1229
      %v1232 = vunpack.c.l.s4 839922192
      %v1233 = vunpack.c.0.s8 %v1232
      %v1234 = vlaneseq
      %v1235 = vshrl.u32 %v1234, 7
      %v1236 = vsub.s32 %v1233, %v1235
      %v1237 = vrot.slane %v1205, %v1236
      %v1242 = vsub.f32 %v1074, %v1216
      %v1243 = vsub.f32 %v1075, %v1216
      %v1244 = vsub.f32 %v1076, %v1223
      %v1245 = vsub.f32 %v1077, %v1223
      %v1246 = vsub.f32 %v1078, %v1230
      %v1247 = vsub.f32 %v1079, %v1230
      %v1248 = vsub.f32 %v1080, %v1237
      %v1249 = vsub.f32 %v1081, %v1237
      %v1250 = vmul.f32 %v1242, 1.442695
      %v1251 = vpow.pop %v1250
      %v1252 = vmul.f32 %v1243, 1.442695
      %v1253 = vpow.pop %v1252
      %v1254 = vmul.f32 %v1244, 1.442695
      %v1255 = vpow.pop %v1254
      %v1256 = vmul.f32 %v1245, 1.442695
      %v1257 = vpow.pop %v1256
      %v1258 = vmul.f32 %v1246, 1.442695
      %v1259 = vpow.pop %v1258
      %v1260 = vmul.f32 %v1247, 1.442695
      %v1261 = vpow.pop %v1260
      %v1262 = vmul.f32 %v1248, 1.442695
      %v1263 = vpow.pop %v1262
      %v1264 = vmul.f32 %v1249, 1.442695
      %v1265 = vpow.pop %v1264
      %v1274 = vlaneseq
      %v1275 = vshrl.u32 %v1274, 7
      %v1276 = vsub.s32 0, %v1275
      %v1277 = vrot.slane %v1251, %v1276
      %v1278 = vlaneseq
      %v1279 = vshrl.u32 %v1278, 7
      %v1280 = vsub.s32 4, %v1279
      %v1281 = vrot.slane %v1251, %v1280
      %v1282 = vlaneseq
      %v1283 = vshrl.u32 %v1282, 7
      %v1284 = vsub.s32 0, %v1283
      %v1285 = vrot.slane %v1253, %v1284
      %v1286 = vlaneseq
      %v1287 = vshrl.u32 %v1286, 7
      %v1288 = vsub.s32 4, %v1287
      %v1289 = vrot.slane %v1253, %v1288
      %v1290 = vlaneseq
      %v1291 = vshrl.u32 %v1290, 7
      %v1292 = vsub.s32 0, %v1291
      %v1293 = vrot.slane %v1255, %v1292
      %v1294 = vlaneseq
      %v1295 = vshrl.u32 %v1294, 7
      %v1296 = vsub.s32 4, %v1295
      %v1297 = vrot.slane %v1255, %v1296
      %v1298 = vlaneseq
      %v1299 = vshrl.u32 %v1298, 7
      %v1300 = vsub.s32 0, %v1299
      %v1301 = vrot.slane %v1257, %v1300
      %v1302 = vlaneseq
      %v1303 = vshrl.u32 %v1302, 7
      %v1304 = vsub.s32 4, %v1303
      %v1305 = vrot.slane %v1257, %v1304
      %v1306 = vlaneseq
      %v1307 = vshrl.u32 %v1306, 7
      %v1308 = vsub.s32 0, %v1307
      %v1309 = vrot.slane %v1259, %v1308
      %v1310 = vlaneseq
      %v1311 = vshrl.u32 %v1310, 7
      %v1312 = vsub.s32 4, %v1311
      %v1313 = vrot.slane %v1259, %v1312
      %v1314 = vlaneseq
      %v1315 = vshrl.u32 %v1314, 7
      %v1316 = vsub.s32 0, %v1315
      %v1317 = vrot.slane %v1261, %v1316
      %v1318 = vlaneseq
      %v1319 = vshrl.u32 %v1318, 7
      %v1320 = vsub.s32 4, %v1319
      %v1321 = vrot.slane %v1261, %v1320
      %v1322 = vlaneseq
      %v1323 = vshrl.u32 %v1322, 7
      %v1324 = vsub.s32 0, %v1323
      %v1325 = vrot.slane %v1263, %v1324
      %v1326 = vlaneseq
      %v1327 = vshrl.u32 %v1326, 7
      %v1328 = vsub.s32 4, %v1327
      %v1329 = vrot.slane %v1263, %v1328
      %v1330 = vlaneseq
      %v1331 = vshrl.u32 %v1330, 7
      %v1332 = vsub.s32 0, %v1331
      %v1333 = vrot.slane %v1265, %v1332
      %v1334 = vlaneseq
      %v1335 = vshrl.u32 %v1334, 7
      %v1336 = vsub.s32 4, %v1335
      %v1337 = vrot.slane %v1265, %v1336
      %v1354 = vsel %vm365, %v1277, 0.0
      %v1355 = vsel %vm365, %v1281, 0.0
      %v1356 = vadd.f32 %v1354, %v1355
      %v1357 = vsel %vm365, %v1285, 0.0
      %v1358 = vadd.f32 %v1356, %v1357
      %v1359 = vsel %vm365, %v1289, 0.0
      %v1360 = vadd.f32 %v1358, %v1359
      %1361 = vadd.xlane.f32.xlu0 %v1360
      %v1362 = vpop.xlane.xlu0 %1361
      %v1363 = vsel %vm365, %v1293, 0.0
      %v1364 = vsel %vm365, %v1297, 0.0
      %v1365 = vadd.f32 %v1363, %v1364
      %v1366 = vsel %vm365, %v1301, 0.0
      %v1367 = vadd.f32 %v1365, %v1366
      %v1368 = vsel %vm365, %v1305, 0.0
      %v1369 = vadd.f32 %v1367, %v1368
      %1370 = vadd.xlane.f32.xlu0 %v1369
      %v1371 = vpop.xlane.xlu0 %1370
      %v1372 = vsel %vm365, %v1309, 0.0
      %v1373 = vsel %vm365, %v1313, 0.0
      %v1374 = vadd.f32 %v1372, %v1373
      %v1375 = vsel %vm365, %v1317, 0.0
      %v1376 = vadd.f32 %v1374, %v1375
      %v1377 = vsel %vm365, %v1321, 0.0
      %v1378 = vadd.f32 %v1376, %v1377
      %1379 = vadd.xlane.f32.xlu0 %v1378
      %v1380 = vpop.xlane.xlu0 %1379
      %v1381 = vsel %vm365, %v1325, 0.0
      %v1382 = vsel %vm365, %v1329, 0.0
      %v1383 = vadd.f32 %v1381, %v1382
      %v1384 = vsel %vm365, %v1333, 0.0
      %v1385 = vadd.f32 %v1383, %v1384
      %v1386 = vsel %vm365, %v1337, 0.0
      %v1387 = vadd.f32 %v1385, %v1386
      %1388 = vadd.xlane.f32.xlu0 %v1387
      %v1389 = vpop.xlane.xlu0 %1388
      %v1395 = vunpack.c.l.s4 839922192
      %v1396 = vunpack.c.0.s8 %v1395
      %v1397 = vlaneseq
      %v1398 = vshrl.u32 %v1397, 7
      %v1399 = vsub.s32 %v1396, %v1398
      %v1400 = vrot.slane %v1362, %v1399
      %v1402 = vunpack.c.l.s4 839922192
      %v1403 = vunpack.c.0.s8 %v1402
      %v1404 = vlaneseq
      %v1405 = vshrl.u32 %v1404, 7
      %v1406 = vsub.s32 %v1403, %v1405
      %v1407 = vrot.slane %v1371, %v1406
      %v1409 = vunpack.c.l.s4 839922192
      %v1410 = vunpack.c.0.s8 %v1409
      %v1411 = vlaneseq
      %v1412 = vshrl.u32 %v1411, 7
      %v1413 = vsub.s32 %v1410, %v1412
      %v1414 = vrot.slane %v1380, %v1413
      %v1416 = vunpack.c.l.s4 839922192
      %v1417 = vunpack.c.0.s8 %v1416
      %v1418 = vlaneseq
      %v1419 = vshrl.u32 %v1418, 7
      %v1420 = vsub.s32 %v1417, %v1419
      %v1421 = vrot.slane %v1389, %v1420
      %v1426 = vrcp.pop %v1400
      %v1427 = vmul.f32 %v1251, %v1426
      %v1428 = vmul.f32 %v1253, %v1426
      %v1429 = vrcp.pop %v1407
      %v1430 = vmul.f32 %v1255, %v1429
      %v1431 = vmul.f32 %v1257, %v1429
      %v1432 = vrcp.pop %v1414
      %v1433 = vmul.f32 %v1259, %v1432
      %v1434 = vmul.f32 %v1261, %v1432
      %v1435 = vrcp.pop %v1421
      %v1436 = vmul.f32 %v1263, %v1435
      %v1437 = vmul.f32 %v1265, %v1435
      %v1446 = vlaneseq
      %v1447 = vshrl.u32 %v1446, 7
      %v1448 = vsub.s32 0, %v1447
      %v1449 = vrot.slane %v1427, %v1448
      %v1450 = vlaneseq
      %v1451 = vshrl.u32 %v1450, 7
      %v1452 = vsub.s32 4, %v1451
      %v1453 = vrot.slane %v1427, %v1452
      %v1454 = vlaneseq
      %v1455 = vshrl.u32 %v1454, 7
      %v1456 = vsub.s32 0, %v1455
      %v1457 = vrot.slane %v1428, %v1456
      %v1458 = vlaneseq
      %v1459 = vshrl.u32 %v1458, 7
      %v1460 = vsub.s32 4, %v1459
      %v1461 = vrot.slane %v1428, %v1460
      %v1462 = vlaneseq
      %v1463 = vshrl.u32 %v1462, 7
      %v1464 = vsub.s32 0, %v1463
      %v1465 = vrot.slane %v1430, %v1464
      %v1466 = vlaneseq
      %v1467 = vshrl.u32 %v1466, 7
      %v1468 = vsub.s32 4, %v1467
      %v1469 = vrot.slane %v1430, %v1468
      %v1470 = vlaneseq
      %v1471 = vshrl.u32 %v1470, 7
      %v1472 = vsub.s32 0, %v1471
      %v1473 = vrot.slane %v1431, %v1472
      %v1474 = vlaneseq
      %v1475 = vshrl.u32 %v1474, 7
      %v1476 = vsub.s32 4, %v1475
      %v1477 = vrot.slane %v1431, %v1476
      %v1478 = vlaneseq
      %v1479 = vshrl.u32 %v1478, 7
      %v1480 = vsub.s32 0, %v1479
      %v1481 = vrot.slane %v1433, %v1480
      %v1482 = vlaneseq
      %v1483 = vshrl.u32 %v1482, 7
      %v1484 = vsub.s32 4, %v1483
      %v1485 = vrot.slane %v1433, %v1484
      %v1486 = vlaneseq
      %v1487 = vshrl.u32 %v1486, 7
      %v1488 = vsub.s32 0, %v1487
      %v1489 = vrot.slane %v1434, %v1488
      %v1490 = vlaneseq
      %v1491 = vshrl.u32 %v1490, 7
      %v1492 = vsub.s32 4, %v1491
      %v1493 = vrot.slane %v1434, %v1492
      %v1494 = vlaneseq
      %v1495 = vshrl.u32 %v1494, 7
      %v1496 = vsub.s32 0, %v1495
      %v1497 = vrot.slane %v1436, %v1496
      %v1498 = vlaneseq
      %v1499 = vshrl.u32 %v1498, 7
      %v1500 = vsub.s32 4, %v1499
      %v1501 = vrot.slane %v1436, %v1500
      %v1502 = vlaneseq
      %v1503 = vshrl.u32 %v1502, 7
      %v1504 = vsub.s32 0, %v1503
      %v1505 = vrot.slane %v1437, %v1504
      %v1506 = vlaneseq
      %v1507 = vshrl.u32 %v1506, 7
      %v1508 = vsub.s32 4, %v1507
      %v1509 = vrot.slane %v1437, %v1508
      %v1526 = vlaneseq
      %v1527 = vshrl.u32 %v1526, 7
      %v1528 = vsub.s32 0, %v1527
      %v1529 = vrot.slane %v1449, %v1528
      %v1530 = vlaneseq
      %v1531 = vshrl.u32 %v1530, 7
      %v1532 = vsub.s32 0, %v1531
      %v1533 = vrot.slane %v1453, %v1532
      %v1534 = vlaneseq
      %v1535 = vshrl.u32 %v1534, 7
      %v1536 = vsub.s32 0, %v1535
      %v1537 = vrot.slane %v1457, %v1536
      %v1538 = vlaneseq
      %v1539 = vshrl.u32 %v1538, 7
      %v1540 = vsub.s32 0, %v1539
      %v1541 = vrot.slane %v1461, %v1540
      %v1542 = vlaneseq
      %v1543 = vshrl.u32 %v1542, 7
      %v1544 = vsub.s32 0, %v1543
      %v1545 = vrot.slane %v1465, %v1544
      %v1546 = vlaneseq
      %v1547 = vshrl.u32 %v1546, 7
      %v1548 = vsub.s32 0, %v1547
      %v1549 = vrot.slane %v1469, %v1548
      %v1550 = vlaneseq
      %v1551 = vshrl.u32 %v1550, 7
      %v1552 = vsub.s32 0, %v1551
      %v1553 = vrot.slane %v1473, %v1552
      %v1554 = vlaneseq
      %v1555 = vshrl.u32 %v1554, 7
      %v1556 = vsub.s32 0, %v1555
      %v1557 = vrot.slane %v1477, %v1556
      %v1558 = vlaneseq
      %v1559 = vshrl.u32 %v1558, 7
      %v1560 = vsub.s32 0, %v1559
      %v1561 = vrot.slane %v1481, %v1560
      %v1562 = vlaneseq
      %v1563 = vshrl.u32 %v1562, 7
      %v1564 = vsub.s32 0, %v1563
      %v1565 = vrot.slane %v1485, %v1564
      %v1566 = vlaneseq
      %v1567 = vshrl.u32 %v1566, 7
      %v1568 = vsub.s32 0, %v1567
      %v1569 = vrot.slane %v1489, %v1568
      %v1570 = vlaneseq
      %v1571 = vshrl.u32 %v1570, 7
      %v1572 = vsub.s32 0, %v1571
      %v1573 = vrot.slane %v1493, %v1572
      %v1574 = vlaneseq
      %v1575 = vshrl.u32 %v1574, 7
      %v1576 = vsub.s32 0, %v1575
      %v1577 = vrot.slane %v1497, %v1576
      %v1578 = vlaneseq
      %v1579 = vshrl.u32 %v1578, 7
      %v1580 = vsub.s32 0, %v1579
      %v1581 = vrot.slane %v1501, %v1580
      %v1582 = vlaneseq
      %v1583 = vshrl.u32 %v1582, 7
      %v1584 = vsub.s32 0, %v1583
      %v1585 = vrot.slane %v1505, %v1584
      %v1586 = vlaneseq
      %v1587 = vshrl.u32 %v1586, 7
      %v1588 = vsub.s32 0, %v1587
      %v1589 = vrot.slane %v1509, %v1588
      %v1590 = vmul.f32 %v1529, %v117
      %v1591 = vmul.f32 %v1533, %v794
      %v1592 = vmul.f32 %v1537, %v118
      %v1593 = vmul.f32 %v1541, %v795
      %v1594 = vmul.f32 %v1545, %v119
      %v1595 = vmul.f32 %v1549, %v796
      %v1596 = vmul.f32 %v1553, %v120
      %v1597 = vmul.f32 %v1557, %v797
      %v1598 = vmul.f32 %v1561, %v121
      %v1599 = vmul.f32 %v1565, %v798
      %v1600 = vmul.f32 %v1569, %v122
      %v1601 = vmul.f32 %v1573, %v799
      %v1602 = vmul.f32 %v1577, %v123
      %v1603 = vmul.f32 %v1581, %v800
      %v1604 = vmul.f32 %v1585, %v124
      %v1605 = vmul.f32 %v1589, %v801
      %v1606 = vadd.f32 %v1590, %v1594
      %v1607 = vadd.f32 %v1591, %v1595
      %v1608 = vadd.f32 %v1592, %v1596
      %v1609 = vadd.f32 %v1593, %v1597
      %v1610 = vadd.f32 %v1606, %v1598
      %v1611 = vadd.f32 %v1607, %v1599
      %v1612 = vadd.f32 %v1608, %v1600
      %v1613 = vadd.f32 %v1609, %v1601
      %v1614 = vadd.f32 %v1610, %v1602
      %v1615 = vadd.f32 %v1611, %v1603
      %v1616 = vadd.f32 %v1612, %v1604
      %v1617 = vadd.f32 %v1613, %v1605
      %v1618 = vand.u32 2147483647, %v1614
      %v1619 = vand.u32 2147483647, %v1615
      %v1620 = vand.u32 2147483647, %v1616
      %v1621 = vand.u32 2147483647, %v1617
      %v1622 = vmul.f32 %v1614, %v1614
      %v1623 = vmul.f32 %v1615, %v1615
      %v1624 = vmul.f32 %v1616, %v1616
      %v1625 = vmul.f32 %v1617, %v1617
      %v1626 = vadd.f32 %v1622, 1.0
      %v1627 = vadd.f32 %v1623, 1.0
      %v1628 = vadd.f32 %v1624, 1.0
      %v1629 = vadd.f32 %v1625, 1.0
      %v1630 = vadd.f32 %v1626, 1e-20
      %v1631 = vadd.f32 %v1627, 1e-20
      %v1632 = vadd.f32 %v1628, 1e-20
      %v1633 = vadd.f32 %v1629, 1e-20
      %v1634 = vrcp.pop %v1630
      %v1635 = vmul.f32 %v1618, %v1634
      %v1636 = vrcp.pop %v1631
      %v1637 = vmul.f32 %v1619, %v1636
      %v1638 = vrcp.pop %v1632
      %v1639 = vmul.f32 %v1620, %v1638
      %v1640 = vrcp.pop %v1633
      %v1641 = vmul.f32 %v1621, %v1640
      %v1642 = vmul.f32 %v1635, %v1614
      %v1643 = vmul.f32 %v1637, %v1615
      %v1644 = vmul.f32 %v1639, %v1616
      %v1645 = vmul.f32 %v1641, %v1617
      %v1650 = vcombine.low %v1642, %v1643
      %v1651 = vcombine.low %v1644, %v1645
      %1654 = vst [vmem:[%s116] sm:$0xff] %v1650
      %1655 = vst [vmem:[%s116 + $0x8] sm:$0xff] %v1651
      %p1656 = scmp.lt.s32.totalorder %s12, 1
      %s1657 = scalar_select %p1656, %s12, 1
      %s1658 = smul.addr %s1657, 4
      %s1659 = smul.addr %s1658, 4
      %s1660 = scalar_lea.vmem %s1, %s1659
      // Predicated region
      $region25: #{conv_caps_layer_3d.3} parent=23 // pred_check
        %p1661 = pneg %p56
      $region26: #{conv_caps_layer_3d.3} parent=23 // pred_check_branch
        %1663 = sbr.rel (%p1661) target = $region28
      $region27: #{conv_caps_layer_3d.3} parent=23 // pred_region
        _
      $region28: #{conv_caps_layer_3d.3} parent=23 // pred_fallthru
        _
    $region24: #{conv_caps_layer_3d.3} parent=5 // pred_fallthru
      _
    %p1664 = scmp.le.s32.totalorder 2, %s7
    // Predicated region
    $region29: #{conv_caps_layer_3d.3} parent=5 // pred_check
      %p1665 = pneg %p1664
    $region30: #{conv_caps_layer_3d.3} parent=5 // pred_check_branch
      %1667 = sbr.rel (%p1665) target = $region32
    $region31: #{conv_caps_layer_3d.3} parent=5 // pred_region
      %s1668 = ssub.s32 %s7, 2
      // Predicated region
      $region33: #{conv_caps_layer_3d.3} parent=31 // pred_check
        %p1669 = pneg %p62
      $region34: #{conv_caps_layer_3d.3} parent=31 // pred_check_branch
        %1671 = sbr.rel (%p1669) target = $region36
      $region35: #{conv_caps_layer_3d.3} parent=31 // pred_region
        %p1672 = scmp.lt.s32.totalorder %s13, 1
        %s1673 = scalar_select %p1672, %s13, 1
        %s1674 = smul.addr %s1673, 4
        %s1675 = smul.addr %s1674, 4
        %s1676 = scalar_lea.vmem %s1, %s1675
      $region36: #{conv_caps_layer_3d.3} parent=31 // pred_fallthru
        _
    $region32: #{conv_caps_layer_3d.3} parent=5 // pred_fallthru
      _
  $region6: #{conv_caps_layer_3d.3} parent=0 // loop_footer
    %s11 = sadd.s32 1, %s7
  $region7: #{conv_caps_layer_3d.3} parent=0 // loop_footer_branch
    %6 = sbr.rel target = $region3
  $region8: #{conv_caps_layer_3d.3} parent=0 // loop_exit
    _

</llo_original>
